<compile_context>
chip_gen: v7x
topology: tpu7x:2x2x1
jax: 0.10.0
libtpu: 0.0.40
codegen_flags: <defaults>
</compile_context>

<pallas_src>
import jax
import jax.numpy as jnp
from jax.experimental import pallas as pl
from jax.experimental.pallas import tpu as pltpu


def _round_up(n, m):
    return ((n + m - 1) // m) * m


def _leaky_relu(x, slope=0.2):
    return jnp.where(x > 0, x, slope * x)


def discriminator_kernel(x_ref,
                         w1_ref, b1_ref,
                         w2_ref, b2_ref,
                         w3_ref, b3_ref,
                         w4_ref, b4_ref,
                         o_ref):
    # x tile: (batch_tile, in_pad) bf16; weights bf16; biases f32.
    x = x_ref[...]

    h = jnp.dot(x, w1_ref[...], preferred_element_type=jnp.float32) + b1_ref[...]
    h = _leaky_relu(h).astype(jnp.bfloat16)

    h = jnp.dot(h, w2_ref[...], preferred_element_type=jnp.float32) + b2_ref[...]
    h = _leaky_relu(h).astype(jnp.bfloat16)

    h = jnp.dot(h, w3_ref[...], preferred_element_type=jnp.float32) + b3_ref[...]
    h = _leaky_relu(h).astype(jnp.bfloat16)          # (tile, hidden) bf16

    # Final Linear(hidden -> 1): contract the (1, hidden) weight row against
    # h (tile, hidden) over the hidden axis -> lane-dense (1, tile) output row
    # (single tiny MXU pass; avoids a 1-wide output column / masked stores).
    z = jax.lax.dot_general(w4_ref[...], h,
                            (((1,), (1,)), ((), ())),
                            preferred_element_type=jnp.float32)   # (1, tile)
    z = z + b4_ref[...]                                            # (1,1) broadcast
    o_ref[...] = jax.nn.sigmoid(z).astype(o_ref.dtype)


def discriminator_forward(x, params, *, batch_tile=512):
    """x: [B, input_dim] float32.  params: dict of w1..w4 ([in,out]) and b1..b4 ([1,out])."""
    B, in_dim = x.shape

    # Batch tile: multiple of 128 so the (1, bt) output block stays lane-aligned
    # on every grid step; K is lane-padded 100 -> 128.
    bt = max(128, _round_up(min(batch_tile, B), 128))
    B_pad = _round_up(B, bt)
    in_pad = _round_up(in_dim, 128)

    # bf16 operands for the HBM-bound streams / MXU; biases stay f32.
    x_p = jnp.pad(x.astype(jnp.bfloat16), ((0, B_pad - B), (0, in_pad - in_dim)))
    w1 = jnp.pad(params["w1"].astype(jnp.bfloat16), ((0, in_pad - in_dim), (0, 0)))
    w2 = params["w2"].astype(jnp.bfloat16)
    w3 = params["w3"].astype(jnp.bfloat16)
    w4_row = params["w4"].astype(jnp.bfloat16).T          # (1, hidden)
    b1, b2, b3, b4 = params["b1"], params["b2"], params["b3"], params["b4"]

    def full(shape):
        # Weight / bias blocks: whole array, same block every grid step
        # (fetched once, VMEM-resident).
        return pl.BlockSpec(shape, lambda i: (0, 0))

    grid = (B_pad // bt,)
    out_row = pl.pallas_call(
        discriminator_kernel,
        out_shape=jax.ShapeDtypeStruct((1, B_pad), jnp.float32),
        grid_spec=pltpu.PrefetchScalarGridSpec(
            num_scalar_prefetch=0,
            grid=grid,
            in_specs=[
                pl.BlockSpec((bt, in_pad), lambda i: (i, 0)),
                full(w1.shape), full(b1.shape),
                full(w2.shape), full(b2.shape),
                full(w3.shape), full(b3.shape),
                full(w4_row.shape), full(b4.shape),
            ],
            out_specs=pl.BlockSpec((1, bt), lambda i: (0, i)),
        ),
        compiler_params=pltpu.CompilerParams(
            dimension_semantics=("parallel",),
            vmem_limit_bytes=64 * 1024 * 1024,
        ),
    )(x_p, w1, b1, w2, b2, w3, b3, w4_row, b4)

    return out_row[0, :B].reshape(B, 1)


def init_params(key, input_dim, hidden_dim):
    """Deterministic synthetic init (PyTorch-Linear-like uniform fan-in bound)."""
    dims = [input_dim, hidden_dim * 4, hidden_dim * 2, hidden_dim, 1]
    params = {}
    for li in range(4):
        fan_in, fan_out = dims[li], dims[li + 1]
        key, kw, kb = jax.random.split(key, 3)
        bound = 1.0 / jnp.sqrt(fan_in)
        params[f"w{li + 1}"] = jax.random.uniform(
            kw, (fan_in, fan_out), jnp.float32, -bound, bound)
        params[f"b{li + 1}"] = jax.random.uniform(
            kb, (1, fan_out), jnp.float32, -bound, bound)
    return params


def reference_forward(x, params):
    """Pure-JAX reference replicating the kernel's precision (bf16 ops, f32 accum)."""
    h = x.astype(jnp.bfloat16)
    for li in range(1, 4):
        w = params[f"w{li}"].astype(jnp.bfloat16)
        h = jnp.dot(h, w, preferred_element_type=jnp.float32) + params[f"b{li}"]
        h = jnp.where(h > 0, h, 0.2 * h).astype(jnp.bfloat16)
    w4 = params["w4"].astype(jnp.bfloat16)
    z = jnp.dot(h, w4, preferred_element_type=jnp.float32) + params["b4"]
    return jax.nn.sigmoid(z)


if __name__ == "__main__":
    input_dim = 100      # module-level constant in models.py
    hidden_dim = 128     # Discriminator default
    batch = 256          # small, but still a 2-step batch grid (2 tiles of 128)

    key = jax.random.PRNGKey(0)
    key, kx = jax.random.split(key)
    x = jax.random.normal(kx, (batch, input_dim), jnp.float32)
    params = init_params(key, input_dim, hidden_dim)

    out = discriminator_forward(x, params, batch_tile=128)
    out = jax.block_until_ready(out)

    ref = reference_forward(x, params)
    assert out.shape == (batch, 1)
    assert jnp.allclose(out, ref, atol=2e-3, rtol=2e-3), "mismatch vs JAX reference"

    print("KERNEL_OK")
</pallas_src>

<mosaic_0001>
module attributes {stable_mosaic.version = 11 : i64} {
  func.func @discriminator_kernel(%arg0: i32, %arg1: memref<128x128xbf16, #tpu.memory_space<vmem>>, %arg2: memref<128x512xbf16, #tpu.memory_space<vmem>>, %arg3: memref<1x512xf32, #tpu.memory_space<vmem>>, %arg4: memref<512x256xbf16, #tpu.memory_space<vmem>>, %arg5: memref<1x256xf32, #tpu.memory_space<vmem>>, %arg6: memref<256x128xbf16, #tpu.memory_space<vmem>>, %arg7: memref<1x128xf32, #tpu.memory_space<vmem>>, %arg8: memref<1x128xbf16, #tpu.memory_space<vmem>>, %arg9: memref<1x1xf32, #tpu.memory_space<vmem>>, %arg10: memref<1x128xf32, #tpu.memory_space<vmem>>) attributes {dimension_semantics = [#tpu.dimension_semantics<parallel>], iteration_bounds = array<i64: 2>, scalar_prefetch = 0 : i64, scratch_operands = 0 : i64, tpu.core_type = #tpu.core_type<tc>, window_params = [{transform_indices = @transform_0, window_bounds = array<i64: 128, 128>}, {pipeline_mode = #tpu.pipeline_mode<synchronous>, transform_indices = @transform_1, window_bounds = array<i64: 128, 512>}, {pipeline_mode = #tpu.pipeline_mode<synchronous>, transform_indices = @transform_2, window_bounds = array<i64: 1, 512>}, {pipeline_mode = #tpu.pipeline_mode<synchronous>, transform_indices = @transform_3, window_bounds = array<i64: 512, 256>}, {pipeline_mode = #tpu.pipeline_mode<synchronous>, transform_indices = @transform_4, window_bounds = array<i64: 1, 256>}, {pipeline_mode = #tpu.pipeline_mode<synchronous>, transform_indices = @transform_5, window_bounds = array<i64: 256, 128>}, {pipeline_mode = #tpu.pipeline_mode<synchronous>, transform_indices = @transform_6, window_bounds = array<i64: 1, 128>}, {pipeline_mode = #tpu.pipeline_mode<synchronous>, transform_indices = @transform_7, window_bounds = array<i64: 1, 128>}, {pipeline_mode = #tpu.pipeline_mode<synchronous>, transform_indices = @transform_8, window_bounds = array<i64: 1, 1>}, {transform_indices = @transform_9, window_bounds = array<i64: 1, 128>}]} {
    %c0 = arith.constant 0 : index
    %c0_0 = arith.constant 0 : index
    %0 = vector.load %arg1[%c0, %c0_0] : memref<128x128xbf16, #tpu.memory_space<vmem>>, vector<128x128xbf16>
    %c0_1 = arith.constant 0 : index
    %c0_2 = arith.constant 0 : index
    %1 = vector.load %arg2[%c0_1, %c0_2] : memref<128x512xbf16, #tpu.memory_space<vmem>>, vector<128x512xbf16>
    %cst = arith.constant dense<0.000000e+00> : vector<128x512xf32>
    %2 = tpu.matmul %0, %1, %cst {dimension_numbers = #tpu.dot_dimension_numbers<[1], [0], [0], [1], [0, 0, 1, 1], [], []>} : vector<128x128xbf16>, vector<128x512xbf16>, vector<128x512xf32> -> vector<128x512xf32>
    %c0_3 = arith.constant 0 : index
    %c0_4 = arith.constant 0 : index
    %3 = vector.load %arg3[%c0_3, %c0_4] : memref<1x512xf32, #tpu.memory_space<vmem>>, vector<1x512xf32>
    %4 = vector.broadcast %3 : vector<1x512xf32> to vector<128x512xf32>
    %5 = arith.addf %2, %4 : vector<128x512xf32>
    %cst_5 = arith.constant 0.000000e+00 : f32
    %6 = vector.broadcast %cst_5 : f32 to vector<128x512xf32>
    %7 = arith.cmpf ogt, %5, %6 : vector<128x512xf32>
    %cst_6 = arith.constant 2.000000e-01 : f32
    %8 = vector.broadcast %cst_6 : f32 to vector<128x512xf32>
    %9 = arith.mulf %8, %5 : vector<128x512xf32>
    %10 = arith.select %7, %5, %9 : vector<128x512xi1>, vector<128x512xf32>
    %11 = arith.truncf %10 : vector<128x512xf32> to vector<128x512xbf16>
    %c0_7 = arith.constant 0 : index
    %c0_8 = arith.constant 0 : index
    %12 = vector.load %arg4[%c0_7, %c0_8] : memref<512x256xbf16, #tpu.memory_space<vmem>>, vector<512x256xbf16>
    %cst_9 = arith.constant dense<0.000000e+00> : vector<128x256xf32>
    %13 = tpu.matmul %11, %12, %cst_9 {dimension_numbers = #tpu.dot_dimension_numbers<[1], [0], [0], [1], [0, 0, 1, 1], [], []>} : vector<128x512xbf16>, vector<512x256xbf16>, vector<128x256xf32> -> vector<128x256xf32>
    %c0_10 = arith.constant 0 : index
    %c0_11 = arith.constant 0 : index
    %14 = vector.load %arg5[%c0_10, %c0_11] : memref<1x256xf32, #tpu.memory_space<vmem>>, vector<1x256xf32>
    %15 = vector.broadcast %14 : vector<1x256xf32> to vector<128x256xf32>
    %16 = arith.addf %13, %15 : vector<128x256xf32>
    %cst_12 = arith.constant 0.000000e+00 : f32
    %17 = vector.broadcast %cst_12 : f32 to vector<128x256xf32>
    %18 = arith.cmpf ogt, %16, %17 : vector<128x256xf32>
    %cst_13 = arith.constant 2.000000e-01 : f32
    %19 = vector.broadcast %cst_13 : f32 to vector<128x256xf32>
    %20 = arith.mulf %19, %16 : vector<128x256xf32>
    %21 = arith.select %18, %16, %20 : vector<128x256xi1>, vector<128x256xf32>
    %22 = arith.truncf %21 : vector<128x256xf32> to vector<128x256xbf16>
    %c0_14 = arith.constant 0 : index
    %c0_15 = arith.constant 0 : index
    %23 = vector.load %arg6[%c0_14, %c0_15] : memref<256x128xbf16, #tpu.memory_space<vmem>>, vector<256x128xbf16>
    %cst_16 = arith.constant dense<0.000000e+00> : vector<128x128xf32>
    %24 = tpu.matmul %22, %23, %cst_16 {dimension_numbers = #tpu.dot_dimension_numbers<[1], [0], [0], [1], [0, 0, 1, 1], [], []>} : vector<128x256xbf16>, vector<256x128xbf16>, vector<128x128xf32> -> vector<128x128xf32>
    %c0_17 = arith.constant 0 : index
    %c0_18 = arith.constant 0 : index
    %25 = vector.load %arg7[%c0_17, %c0_18] : memref<1x128xf32, #tpu.memory_space<vmem>>, vector<1x128xf32>
    %26 = vector.broadcast %25 : vector<1x128xf32> to vector<128x128xf32>
    %27 = arith.addf %24, %26 : vector<128x128xf32>
    %cst_19 = arith.constant 0.000000e+00 : f32
    %28 = vector.broadcast %cst_19 : f32 to vector<128x128xf32>
    %29 = arith.cmpf ogt, %27, %28 : vector<128x128xf32>
    %cst_20 = arith.constant 2.000000e-01 : f32
    %30 = vector.broadcast %cst_20 : f32 to vector<128x128xf32>
    %31 = arith.mulf %30, %27 : vector<128x128xf32>
    %32 = arith.select %29, %27, %31 : vector<128x128xi1>, vector<128x128xf32>
    %33 = arith.truncf %32 : vector<128x128xf32> to vector<128x128xbf16>
    %c0_21 = arith.constant 0 : index
    %c0_22 = arith.constant 0 : index
    %34 = vector.load %arg8[%c0_21, %c0_22] : memref<1x128xbf16, #tpu.memory_space<vmem>>, vector<1x128xbf16>
    %cst_23 = arith.constant dense<0.000000e+00> : vector<1x128xf32>
    %35 = tpu.matmul %34, %33, %cst_23 {dimension_numbers = #tpu.dot_dimension_numbers<[1], [1], [0], [0], [0, 0, 1, 0], [], []>} : vector<1x128xbf16>, vector<128x128xbf16>, vector<1x128xf32> -> vector<1x128xf32>
    %c0_24 = arith.constant 0 : index
    %c0_25 = arith.constant 0 : index
    %36 = vector.load %arg9[%c0_24, %c0_25] : memref<1x1xf32, #tpu.memory_space<vmem>>, vector<1x1xf32>
    %37 = vector.broadcast %36 : vector<1x1xf32> to vector<1x128xf32>
    %38 = arith.addf %35, %37 : vector<1x128xf32>
    %39 = arith.negf %38 : vector<1x128xf32>
    %40 = math.exp %39 : vector<1x128xf32>
    %cst_26 = arith.constant 1.000000e+00 : f32
    %41 = vector.broadcast %cst_26 : f32 to vector<1x128xf32>
    %42 = arith.addf %41, %40 : vector<1x128xf32>
    %43 = arith.divf %41, %42 : vector<1x128xf32>
    %c0_27 = arith.constant 0 : index
    %c0_28 = arith.constant 0 : index
    %44 = vector.load %arg10[%c0_27, %c0_28] : memref<1x128xf32, #tpu.memory_space<vmem>>, vector<1x128xf32>
    tpu.vector_store %arg10[%c0_27, %c0_28], %43 {strides = array<i32>} : memref<1x128xf32, #tpu.memory_space<vmem>>, vector<1x128xf32>,
    return
  }
  func.func @transform_0(%arg0: i32) -> (i32, i32) {
    %c0_i32 = arith.constant 0 : i32
    %c0_i32_0 = arith.constant 0 : i32
    return %arg0, %c0_i32 : i32, i32
  }
  func.func @transform_1(%arg0: i32) -> (i32, i32) {
    %c0_i32 = arith.constant 0 : i32
    %c0_i32_0 = arith.constant 0 : i32
    %c0_i32_1 = arith.constant 0 : i32
    return %c0_i32, %c0_i32_0 : i32, i32
  }
  func.func @transform_2(%arg0: i32) -> (i32, i32) {
    %c0_i32 = arith.constant 0 : i32
    %c0_i32_0 = arith.constant 0 : i32
    %c0_i32_1 = arith.constant 0 : i32
    return %c0_i32, %c0_i32_0 : i32, i32
  }
  func.func @transform_3(%arg0: i32) -> (i32, i32) {
    %c0_i32 = arith.constant 0 : i32
    %c0_i32_0 = arith.constant 0 : i32
    %c0_i32_1 = arith.constant 0 : i32
    return %c0_i32, %c0_i32_0 : i32, i32
  }
  func.func @transform_4(%arg0: i32) -> (i32, i32) {
    %c0_i32 = arith.constant 0 : i32
    %c0_i32_0 = arith.constant 0 : i32
    %c0_i32_1 = arith.constant 0 : i32
    return %c0_i32, %c0_i32_0 : i32, i32
  }
  func.func @transform_5(%arg0: i32) -> (i32, i32) {
    %c0_i32 = arith.constant 0 : i32
    %c0_i32_0 = arith.constant 0 : i32
    %c0_i32_1 = arith.constant 0 : i32
    return %c0_i32, %c0_i32_0 : i32, i32
  }
  func.func @transform_6(%arg0: i32) -> (i32, i32) {
    %c0_i32 = arith.constant 0 : i32
    %c0_i32_0 = arith.constant 0 : i32
    %c0_i32_1 = arith.constant 0 : i32
    return %c0_i32, %c0_i32_0 : i32, i32
  }
  func.func @transform_7(%arg0: i32) -> (i32, i32) {
    %c0_i32 = arith.constant 0 : i32
    %c0_i32_0 = arith.constant 0 : i32
    %c0_i32_1 = arith.constant 0 : i32
    return %c0_i32, %c0_i32_0 : i32, i32
  }
  func.func @transform_8(%arg0: i32) -> (i32, i32) {
    %c0_i32 = arith.constant 0 : i32
    %c0_i32_0 = arith.constant 0 : i32
    %c0_i32_1 = arith.constant 0 : i32
    return %c0_i32, %c0_i32_0 : i32, i32
  }
  func.func @transform_9(%arg0: i32) -> (i32, i32) {
    %c0_i32 = arith.constant 0 : i32
    %c0_i32_0 = arith.constant 0 : i32
    return %c0_i32, %arg0 : i32, i32
  }
}

</mosaic_0001>

<llo_original>
// kernel: tpu_custom_call.1
$region0: #{tpu_custom_call.1}
  #allocation0 [shape = 'u32[]', space=smem, size = 0x4, offset = 0x4, fixed_abs, tag = 'smem constant byte address 0x4 - core index']
  #allocation1 [shape = 'u32[144,128]{1,0:T(1,128)}', space=vmem, size = 0x12000, scoped, tag = 'internal scratch']
  #allocation2 [shape = 'f32[1,1]{1,0:T(1,128)S(1)}', space=vmem, size = 0x200, scoped, tag = 'scoped memory for tpu_custom_call.1']
  %s0 = inlined_call_operand.hbm [shape: bf16[256,128], index: 0, kind: input, shape index: {}]
  %s1 = inlined_call_operand.hbm [shape: bf16[128,512], index: 1, kind: input, shape index: {}]
  %s2 = inlined_call_operand.hbm [shape: f32[1,512], index: 2, kind: input, shape index: {}]
  %s3 = inlined_call_operand.hbm [shape: bf16[512,256], index: 3, kind: input, shape index: {}]
  %s4 = inlined_call_operand.hbm [shape: f32[1,256], index: 4, kind: input, shape index: {}]
  %s5 = inlined_call_operand.hbm [shape: bf16[256,128], index: 5, kind: input, shape index: {}]
  %s6 = inlined_call_operand.hbm [shape: f32[1,128], index: 6, kind: input, shape index: {}]
  %s7 = inlined_call_operand.hbm [shape: bf16[1,128], index: 7, kind: input, shape index: {}]
  %s8 = inlined_call_operand.<no memory space> [shape: f32[1,1], index: 8, kind: input, shape index: {}]
  %s9 = inlined_call_operand.hbm [shape: f32[1,256], index: 9, kind: output, shape index: {}]
  %s10 = sld [smem:[#allocation0]]
  $region101: #{tpu_custom_call.1} parent=0
    _
  %s12 = ssub.s32 1, %s10
  %s13 = scalar_select 0, %s12, %s10
  %v14 = vstv %s8
  %15 = vst [vmem:[#allocation2] sm:$0x1] %v14
  $region1: #{tpu_custom_call.1} parent=0
    #allocation3 [shape = 'u8[65536]{0}', space=vmem, size = 0x10000, scoped, tag = 'input window, operand 0']
    #allocation4 [shape = 's32[2]{0}', space=sflag, size = 0x8, scoped, tag = 'scoped memory for tpu_custom_call.1']
    #allocation5 [shape = 's32[2]{0}', space=sflag, size = 0x8, scoped, tag = 'scoped memory for tpu_custom_call.1']
    #allocation6 [shape = 'u8[131072]{0}', space=vmem, size = 0x20000, scoped, tag = 'input window, operand 1, single buffered']
    #allocation7 [shape = 's32[1]{0}', space=sflag, size = 0x4, scoped, tag = 'scoped memory for tpu_custom_call.1']
    #allocation8 [shape = 'u8[2048]{0}', space=vmem, size = 0x800, scoped, tag = 'input window, operand 2, single buffered']
    #allocation9 [shape = 'u8[262144]{0}', space=vmem, size = 0x40000, scoped, tag = 'input window, operand 3, single buffered']
    #allocation10 [shape = 's32[1]{0}', space=sflag, size = 0x4, scoped, tag = 'scoped memory for tpu_custom_call.1']
    #allocation11 [shape = 'u8[1024]{0}', space=vmem, size = 0x400, scoped, tag = 'input window, operand 4, single buffered']
    #allocation12 [shape = 'u8[65536]{0}', space=vmem, size = 0x10000, scoped, tag = 'input window, operand 5, single buffered']
    #allocation13 [shape = 's32[1]{0}', space=sflag, size = 0x4, scoped, tag = 'scoped memory for tpu_custom_call.1']
    #allocation14 [shape = 'u8[512]{0}', space=vmem, size = 0x400, scoped, tag = 'input window, operand 6, single buffered']
    #allocation15 [shape = 'u8[512]{0}', space=vmem, size = 0x400, scoped, tag = 'input window, operand 7, single buffered']
    #allocation16 [shape = 's32[1]{0}', space=sflag, size = 0x4, scoped, tag = 'scoped memory for tpu_custom_call.1']
    #allocation17 [shape = 'u8[1024]{0}', space=vmem, size = 0x400, scoped, tag = 'output window, operand 0']
    %16 = vsyncpa [#allocation4], 0
    %s17 = scalar_lea.sflag [#allocation4], 1
    %18 = vsyncpa %s17, 0
    %19 = vsyncpa [#allocation7], 0
    %20 = vsyncpa [#allocation10], 0
    %21 = vsyncpa [#allocation13], 0
    %22 = vsyncpa [#allocation16], 0
    %23 = vsyncpa [#allocation5], 0
    %s24 = scalar_lea.sflag [#allocation5], 1
    %25 = vsyncpa %s24, 0
    loop: start=0, step=1, limit=4
    $region2: #{tpu_custom_call.1} parent=1 // loop_pre_header
      _
    $region3: #{tpu_custom_call.1} parent=1 // loop_header
      %s27 = sphi 0, %s31
      %p28 = scmp.ge.s32.totalorder %s27, 4
      %s37 = sphi 0, %s39
      %s40 = sphi 0, %s37
      %s41 = sphi 0, %s40
      %s57 = sphi 0, %s41
      %s61 = sphi 0, %s61
      %s63 = sphi 0, %s61
      %s64 = sphi 0, %s63
      %s78 = sphi 0, %s64
      %s82 = sphi 0, %s82
      %s84 = sphi 0, %s82
      %s85 = sphi 0, %s84
      %s99 = sphi 0, %s85
      %s103 = sphi 0, %s103
      %s105 = sphi 0, %s103
      %s106 = sphi 0, %s105
      %s120 = sphi 0, %s106
      %s124 = sphi 0, %s124
      %s126 = sphi 0, %s124
      %s127 = sphi 0, %s126
      %s141 = sphi 0, %s127
      %s145 = sphi 0, %s145
      %s147 = sphi 0, %s145
      %s148 = sphi 0, %s147
      %s162 = sphi 0, %s148
      %s166 = sphi 0, %s166
      %s168 = sphi 0, %s166
      %s169 = sphi 0, %s168
      %s183 = sphi 0, %s169
      %s187 = sphi 0, %s187
      %s189 = sphi 0, %s187
      %s190 = sphi 0, %s189
      %s204 = sphi 0, %s190
      %s208 = sphi 0, %s208
      %s210 = sphi 0, %s208
      %s211 = sphi 0, %s210
      %s225 = sphi 0, %s211
      %s231 = sphi 0, %s233
      %s234 = sphi 0, %s231
      %s235 = sphi 0, %s234
      %s251 = sphi 0, %s235
    $region4: #{tpu_custom_call.1} parent=1 // loop_header_branch
      %30 = sbr.rel (%p28) target = $region8
    $region5: #{tpu_custom_call.1} parent=1 // loop_body
      %s32 = ssub.s32 %s27, 1
      %s33 = ssub.s32 %s27, 2
      %s34 = sadd.s32 %s27, 1
      %s35 = ssub.s32 %s27, %s34
      %p36 = scmp.eq.s32.totalorder %s35, 0
      %s38 = sadd.s32 %s37, 1
      %s39 = scalar_select %p36, %s37, %s38
      %p42 = pneg %p36
      %p43 = scmp.eq.s32.totalorder %s27, 1
      %p44 = por %p42, %p43
      %p45 = scmp.ne.s32.totalorder %s37, %s40
      %p46 = scmp.eq.s32.totalorder %s27, 0
      %p47 = por %p45, %p46
      %p48 = scmp.ne.s32.totalorder %s37, %s40
      %p49 = scmp.eq.s32.totalorder %s32, 1
      %p50 = por %p48, %p49
      %p51 = scmp.ne.s32.totalorder %s40, %s41
      %p52 = scmp.eq.s32.totalorder %s32, 0
      %p53 = por %p51, %p52
      %p54 = scmp.ne.s32.totalorder %s40, %s41
      %p55 = scmp.eq.s32.totalorder %s33, 1
      %p56 = por %p54, %p55
      %p58 = scmp.ne.s32.totalorder %s41, %s57
      %p59 = scmp.eq.s32.totalorder %s33, 0
      %p60 = por %p58, %p59
      %s62 = sadd.s32 %s61, 1
      %p65 = scmp.eq.s32.totalorder %s27, 1
      %p66 = scmp.ne.s32.totalorder %s61, %s63
      %p67 = scmp.eq.s32.totalorder %s27, 0
      %p68 = por %p66, %p67
      %p69 = scmp.ne.s32.totalorder %s61, %s63
      %p70 = scmp.eq.s32.totalorder %s32, 1
      %p71 = por %p69, %p70
      %p72 = scmp.ne.s32.totalorder %s63, %s64
      %p73 = scmp.eq.s32.totalorder %s32, 0
      %p74 = por %p72, %p73
      %p75 = scmp.ne.s32.totalorder %s63, %s64
      %p76 = scmp.eq.s32.totalorder %s33, 1
      %p77 = por %p75, %p76
      %p79 = scmp.ne.s32.totalorder %s64, %s78
      %p80 = scmp.eq.s32.totalorder %s33, 0
      %p81 = por %p79, %p80
      %s83 = sadd.s32 %s82, 1
      %p86 = scmp.eq.s32.totalorder %s27, 1
      %p87 = scmp.ne.s32.totalorder %s82, %s84
      %p88 = scmp.eq.s32.totalorder %s27, 0
      %p89 = por %p87, %p88
      %p90 = scmp.ne.s32.totalorder %s82, %s84
      %p91 = scmp.eq.s32.totalorder %s32, 1
      %p92 = por %p90, %p91
      %p93 = scmp.ne.s32.totalorder %s84, %s85
      %p94 = scmp.eq.s32.totalorder %s32, 0
      %p95 = por %p93, %p94
      %p96 = scmp.ne.s32.totalorder %s84, %s85
      %p97 = scmp.eq.s32.totalorder %s33, 1
      %p98 = por %p96, %p97
      %p100 = scmp.ne.s32.totalorder %s85, %s99
      %p101 = scmp.eq.s32.totalorder %s33, 0
      %p102 = por %p100, %p101
      %s104 = sadd.s32 %s103, 1
      %p107 = scmp.eq.s32.totalorder %s27, 1
      %p108 = scmp.ne.s32.totalorder %s103, %s105
      %p109 = scmp.eq.s32.totalorder %s27, 0
      %p110 = por %p108, %p109
      %p111 = scmp.ne.s32.totalorder %s103, %s105
      %p112 = scmp.eq.s32.totalorder %s32, 1
      %p113 = por %p111, %p112
      %p114 = scmp.ne.s32.totalorder %s105, %s106
      %p115 = scmp.eq.s32.totalorder %s32, 0
      %p116 = por %p114, %p115
      %p117 = scmp.ne.s32.totalorder %s105, %s106
      %p118 = scmp.eq.s32.totalorder %s33, 1
      %p119 = por %p117, %p118
      %p121 = scmp.ne.s32.totalorder %s106, %s120
      %p122 = scmp.eq.s32.totalorder %s33, 0
      %p123 = por %p121, %p122
      %s125 = sadd.s32 %s124, 1
      %p128 = scmp.eq.s32.totalorder %s27, 1
      %p129 = scmp.ne.s32.totalorder %s124, %s126
      %p130 = scmp.eq.s32.totalorder %s27, 0
      %p131 = por %p129, %p130
      %p132 = scmp.ne.s32.totalorder %s124, %s126
      %p133 = scmp.eq.s32.totalorder %s32, 1
      %p134 = por %p132, %p133
      %p135 = scmp.ne.s32.totalorder %s126, %s127
      %p136 = scmp.eq.s32.totalorder %s32, 0
      %p137 = por %p135, %p136
      %p138 = scmp.ne.s32.totalorder %s126, %s127
      %p139 = scmp.eq.s32.totalorder %s33, 1
      %p140 = por %p138, %p139
      %p142 = scmp.ne.s32.totalorder %s127, %s141
      %p143 = scmp.eq.s32.totalorder %s33, 0
      %p144 = por %p142, %p143
      %s146 = sadd.s32 %s145, 1
      %p149 = scmp.eq.s32.totalorder %s27, 1
      %p150 = scmp.ne.s32.totalorder %s145, %s147
      %p151 = scmp.eq.s32.totalorder %s27, 0
      %p152 = por %p150, %p151
      %p153 = scmp.ne.s32.totalorder %s145, %s147
      %p154 = scmp.eq.s32.totalorder %s32, 1
      %p155 = por %p153, %p154
      %p156 = scmp.ne.s32.totalorder %s147, %s148
      %p157 = scmp.eq.s32.totalorder %s32, 0
      %p158 = por %p156, %p157
      %p159 = scmp.ne.s32.totalorder %s147, %s148
      %p160 = scmp.eq.s32.totalorder %s33, 1
      %p161 = por %p159, %p160
      %p163 = scmp.ne.s32.totalorder %s148, %s162
      %p164 = scmp.eq.s32.totalorder %s33, 0
      %p165 = por %p163, %p164
      %s167 = sadd.s32 %s166, 1
      %p170 = scmp.eq.s32.totalorder %s27, 1
      %p171 = scmp.ne.s32.totalorder %s166, %s168
      %p172 = scmp.eq.s32.totalorder %s27, 0
      %p173 = por %p171, %p172
      %p174 = scmp.ne.s32.totalorder %s166, %s168
      %p175 = scmp.eq.s32.totalorder %s32, 1
      %p176 = por %p174, %p175
      %p177 = scmp.ne.s32.totalorder %s168, %s169
      %p178 = scmp.eq.s32.totalorder %s32, 0
      %p179 = por %p177, %p178
      %p180 = scmp.ne.s32.totalorder %s168, %s169
      %p181 = scmp.eq.s32.totalorder %s33, 1
      %p182 = por %p180, %p181
      %p184 = scmp.ne.s32.totalorder %s169, %s183
      %p185 = scmp.eq.s32.totalorder %s33, 0
      %p186 = por %p184, %p185
      %s188 = sadd.s32 %s187, 1
      %p191 = scmp.eq.s32.totalorder %s27, 1
      %p192 = scmp.ne.s32.totalorder %s187, %s189
      %p193 = scmp.eq.s32.totalorder %s27, 0
      %p194 = por %p192, %p193
      %p195 = scmp.ne.s32.totalorder %s187, %s189
      %p196 = scmp.eq.s32.totalorder %s32, 1
      %p197 = por %p195, %p196
      %p198 = scmp.ne.s32.totalorder %s189, %s190
      %p199 = scmp.eq.s32.totalorder %s32, 0
      %p200 = por %p198, %p199
      %p201 = scmp.ne.s32.totalorder %s189, %s190
      %p202 = scmp.eq.s32.totalorder %s33, 1
      %p203 = por %p201, %p202
      %p205 = scmp.ne.s32.totalorder %s190, %s204
      %p206 = scmp.eq.s32.totalorder %s33, 0
      %p207 = por %p205, %p206
      %s209 = sadd.s32 %s208, 1
      %p212 = scmp.eq.s32.totalorder %s27, 1
      %p213 = scmp.ne.s32.totalorder %s208, %s210
      %p214 = scmp.eq.s32.totalorder %s27, 0
      %p215 = por %p213, %p214
      %p216 = scmp.ne.s32.totalorder %s208, %s210
      %p217 = scmp.eq.s32.totalorder %s32, 1
      %p218 = por %p216, %p217
      %p219 = scmp.ne.s32.totalorder %s210, %s211
      %p220 = scmp.eq.s32.totalorder %s32, 0
      %p221 = por %p219, %p220
      %p222 = scmp.ne.s32.totalorder %s210, %s211
      %p223 = scmp.eq.s32.totalorder %s33, 1
      %p224 = por %p222, %p223
      %p226 = scmp.ne.s32.totalorder %s211, %s225
      %p227 = scmp.eq.s32.totalorder %s33, 0
      %p228 = por %p226, %p227
      %s229 = ssub.s32 %s27, %s34
      %p230 = scmp.eq.s32.totalorder %s229, 0
      %s232 = sadd.s32 %s231, 1
      %s233 = scalar_select %p230, %s231, %s232
      %p236 = pneg %p230
      %p237 = scmp.eq.s32.totalorder %s27, 1
      %p238 = por %p236, %p237
      %p239 = scmp.ne.s32.totalorder %s231, %s234
      %p240 = scmp.eq.s32.totalorder %s27, 0
      %p241 = por %p239, %p240
      %p242 = scmp.ne.s32.totalorder %s231, %s234
      %p243 = scmp.eq.s32.totalorder %s32, 1
      %p244 = por %p242, %p243
      %p245 = scmp.ne.s32.totalorder %s234, %s235
      %p246 = scmp.eq.s32.totalorder %s32, 0
      %p247 = por %p245, %p246
      %p248 = scmp.ne.s32.totalorder %s234, %s235
      %p249 = scmp.eq.s32.totalorder %s33, 1
      %p250 = por %p248, %p249
      %p252 = scmp.ne.s32.totalorder %s235, %s251
      %p253 = scmp.eq.s32.totalorder %s33, 0
      %p254 = por %p252, %p253
      %p255 = scmp.le.s32.totalorder 1, %s27
      %p256 = scmp.lt.s32.totalorder %s27, 3
      %p257 = pnand %p255, %p256
      %p258 = pneg %p257
      // Predicated region
      $region9: #{tpu_custom_call.1} parent=5 // pred_check
        _
      $region10: #{tpu_custom_call.1} parent=5 // pred_check_branch
        %260 = sbr.rel (%p257) target = $region12
      $region11: #{tpu_custom_call.1} parent=5 // pred_region
        %s261 = ssub.s32 %s27, 1
        // Predicated region
        $region13: #{tpu_custom_call.1} parent=11 // pred_check
          %p262 = pneg %p74
        $region14: #{tpu_custom_call.1} parent=11 // pred_check_branch
          %264 = sbr.rel (%p262) target = $region16
        $region15: #{tpu_custom_call.1} parent=11 // pred_region
          %s266 = ssub.s32 4096, 4096
          %267 = vsyncadd [#allocation7], %s266
          %s268 = sshll.u32 [#allocation6], 4
          %s269 = int_to_ptr.vmem [resolvable:$true] %s268
          %274 = dma.hbm_to_vmem [thread:$0]  %s1, 4096, %s269, [#allocation7], 256, 256, 16
        $region16: #{tpu_custom_call.1} parent=11 // pred_fallthru
          _
        // Predicated region
        $region17: #{tpu_custom_call.1} parent=11 // pred_check
          %p275 = pneg %p95
        $region18: #{tpu_custom_call.1} parent=11 // pred_check_branch
          %277 = sbr.rel (%p275) target = $region20
        $region19: #{tpu_custom_call.1} parent=11 // pred_region
          %s279 = ssub.s32 64, 64
          %280 = vsyncadd [#allocation7], %s279
          %s282 = sshll.u32 [#allocation8], 4
          %s283 = int_to_ptr.vmem [resolvable:$true] %s282
          %285 = dma.hbm_to_vmem [thread:$0]  %s2, 64, %s283, [#allocation7]
        $region20: #{tpu_custom_call.1} parent=11 // pred_fallthru
          _
        // Predicated region
        $region21: #{tpu_custom_call.1} parent=11 // pred_check
          %p286 = pneg %p116
        $region22: #{tpu_custom_call.1} parent=11 // pred_check_branch
          %288 = sbr.rel (%p286) target = $region24
        $region23: #{tpu_custom_call.1} parent=11 // pred_region
          %s290 = ssub.s32 8192, 8192
          %291 = vsyncadd [#allocation10], %s290
          %s292 = sshll.u32 [#allocation9], 4
          %s293 = int_to_ptr.vmem [resolvable:$true] %s292
          %298 = dma.hbm_to_vmem [thread:$0]  %s3, 8192, %s293, [#allocation10], 128, 128, 8
        $region24: #{tpu_custom_call.1} parent=11 // pred_fallthru
          _
        // Predicated region
        $region25: #{tpu_custom_call.1} parent=11 // pred_check
          %p299 = pneg %p137
        $region26: #{tpu_custom_call.1} parent=11 // pred_check_branch
          %301 = sbr.rel (%p299) target = $region28
        $region27: #{tpu_custom_call.1} parent=11 // pred_region
          %s303 = ssub.s32 32, 32
          %304 = vsyncadd [#allocation10], %s303
          %s306 = sshll.u32 [#allocation11], 4
          %s307 = int_to_ptr.vmem [resolvable:$true] %s306
          %309 = dma.hbm_to_vmem [thread:$0]  %s4, 32, %s307, [#allocation10]
        $region28: #{tpu_custom_call.1} parent=11 // pred_fallthru
          _
        // Predicated region
        $region29: #{tpu_custom_call.1} parent=11 // pred_check
          %p310 = pneg %p158
        $region30: #{tpu_custom_call.1} parent=11 // pred_check_branch
          %312 = sbr.rel (%p310) target = $region32
        $region31: #{tpu_custom_call.1} parent=11 // pred_region
          %s314 = ssub.s32 2048, 2048
          %315 = vsyncadd [#allocation13], %s314
          %s316 = sshll.u32 [#allocation12], 4
          %s317 = int_to_ptr.vmem [resolvable:$true] %s316
          %322 = dma.hbm_to_vmem [thread:$0]  %s5, 2048, %s317, [#allocation13], 64, 64, 4
        $region32: #{tpu_custom_call.1} parent=11 // pred_fallthru
          _
        // Predicated region
        $region33: #{tpu_custom_call.1} parent=11 // pred_check
          %p323 = pneg %p179
        $region34: #{tpu_custom_call.1} parent=11 // pred_check_branch
          %325 = sbr.rel (%p323) target = $region36
        $region35: #{tpu_custom_call.1} parent=11 // pred_region
          %s327 = ssub.s32 16, 16
          %328 = vsyncadd [#allocation13], %s327
          %s330 = sshll.u32 [#allocation14], 4
          %s331 = int_to_ptr.vmem [resolvable:$true] %s330
          %333 = dma.hbm_to_vmem [thread:$0]  %s6, 16, %s331, [#allocation13]
        $region36: #{tpu_custom_call.1} parent=11 // pred_fallthru
          _
        // Predicated region
        $region37: #{tpu_custom_call.1} parent=11 // pred_check
          %p334 = pneg %p200
        $region38: #{tpu_custom_call.1} parent=11 // pred_check_branch
          %336 = sbr.rel (%p334) target = $region40
        $region39: #{tpu_custom_call.1} parent=11 // pred_region
          %s338 = ssub.s32 16, 16
          %339 = vsyncadd [#allocation16], %s338
          %s341 = sshll.u32 [#allocation15], 4
          %s342 = int_to_ptr.vmem [resolvable:$true] %s341
          %344 = dma.hbm_to_vmem [thread:$0]  %s7, 16, %s342, [#allocation16]
        $region40: #{tpu_custom_call.1} parent=11 // pred_fallthru
          _
        // Predicated region
        $region41: #{tpu_custom_call.1} parent=11 // pred_check
          %p345 = pneg %p221
        $region42: #{tpu_custom_call.1} parent=11 // pred_check_branch
          %347 = sbr.rel (%p345) target = $region44
        $region43: #{tpu_custom_call.1} parent=11 // pred_region
          _
        $region44: #{tpu_custom_call.1} parent=11 // pred_fallthru
          _
      $region12: #{tpu_custom_call.1} parent=5 // pred_fallthru
        _
      %p348 = scmp.lt.s32.totalorder %s27, 2
      // Predicated region
      $region45: #{tpu_custom_call.1} parent=5 // pred_check
        %p349 = pneg %p348
      $region46: #{tpu_custom_call.1} parent=5 // pred_check_branch
        %351 = sbr.rel (%p349) target = $region48
      $region47: #{tpu_custom_call.1} parent=5 // pred_region
        // Predicated region
        $region49: #{tpu_custom_call.1} parent=47 // pred_check
          %p352 = pneg %p47
        $region50: #{tpu_custom_call.1} parent=47 // pred_check_branch
          %354 = sbr.rel (%p352) target = $region52
        $region51: #{tpu_custom_call.1} parent=47 // pred_region
          %s355 = sand.u32 %s37, 1
          %s356 = scalar_lea.sflag [#allocation4], %s355
          %s357 = sand.u32 %s37, 1
          %s358 = smul.addr %s357, 64
          %s359 = scalar_lea.vmem [#allocation3], %s358
          %s360 = smul.u32 16, %s27
          %s362 = ssub.s32 1024, 1024
          %363 = vsyncadd %s356, %s362
          %s364 = smul.addr %s360, 64
          %s365 = scalar_lea.hbm %s0, %s364
          %s366 = sshll.u32 %s359, 4
          %s367 = int_to_ptr.vmem [resolvable:$true] %s366
          %372 = dma.hbm_to_vmem [thread:$0]  %s365, 1024, %s367, %s356, 64, 64, 4
        $region52: #{tpu_custom_call.1} parent=47 // pred_fallthru
          _
      $region48: #{tpu_custom_call.1} parent=5 // pred_fallthru
        _
      %p373 = scmp.le.s32.totalorder 1, %s27
      %p374 = scmp.lt.s32.totalorder %s27, 3
      %p375 = pnand %p373, %p374
      %p376 = pneg %p375
      // Predicated region
      $region53: #{tpu_custom_call.1} parent=5 // pred_check
        _
      $region54: #{tpu_custom_call.1} parent=5 // pred_check_branch
        %378 = sbr.rel (%p375) target = $region56
      $region55: #{tpu_custom_call.1} parent=5 // pred_region
        %s379 = ssub.s32 %s27, 1
        %s380 = sand.u32 %s40, 1
        %s381 = scalar_lea.sflag [#allocation4], %s380
        %s382 = sand.u32 %s40, 1
        %s383 = smul.addr %s382, 64
        %s384 = scalar_lea.vmem [#allocation3], %s383
        // Predicated region
        $region57: #{tpu_custom_call.1} parent=55 // pred_check
          %p385 = pneg %p53
        $region58: #{tpu_custom_call.1} parent=55 // pred_check_branch
          %387 = sbr.rel (%p385) target = $region60
        $region59: #{tpu_custom_call.1} parent=55 // pred_region
          %388 = dma.done %s381, 1024
        $region60: #{tpu_custom_call.1} parent=55 // pred_fallthru
          _
        // Predicated region
        $region61: #{tpu_custom_call.1} parent=55 // pred_check
          %p389 = pneg %p74
        $region62: #{tpu_custom_call.1} parent=55 // pred_check_branch
          %391 = sbr.rel (%p389) target = $region64
        $region63: #{tpu_custom_call.1} parent=55 // pred_region
          %392 = dma.done [#allocation7], 4096
        $region64: #{tpu_custom_call.1} parent=55 // pred_fallthru
          _
        // Predicated region
        $region65: #{tpu_custom_call.1} parent=55 // pred_check
          %p393 = pneg %p95
        $region66: #{tpu_custom_call.1} parent=55 // pred_check_branch
          %395 = sbr.rel (%p393) target = $region68
        $region67: #{tpu_custom_call.1} parent=55 // pred_region
          %396 = dma.done [#allocation7], 64
        $region68: #{tpu_custom_call.1} parent=55 // pred_fallthru
          _
        // Predicated region
        $region69: #{tpu_custom_call.1} parent=55 // pred_check
          %p397 = pneg %p116
        $region70: #{tpu_custom_call.1} parent=55 // pred_check_branch
          %399 = sbr.rel (%p397) target = $region72
        $region71: #{tpu_custom_call.1} parent=55 // pred_region
          %400 = dma.done [#allocation10], 8192
        $region72: #{tpu_custom_call.1} parent=55 // pred_fallthru
          _
        // Predicated region
        $region73: #{tpu_custom_call.1} parent=55 // pred_check
          %p401 = pneg %p137
        $region74: #{tpu_custom_call.1} parent=55 // pred_check_branch
          %403 = sbr.rel (%p401) target = $region76
        $region75: #{tpu_custom_call.1} parent=55 // pred_region
          %404 = dma.done [#allocation10], 32
        $region76: #{tpu_custom_call.1} parent=55 // pred_fallthru
          _
        // Predicated region
        $region77: #{tpu_custom_call.1} parent=55 // pred_check
          %p405 = pneg %p158
        $region78: #{tpu_custom_call.1} parent=55 // pred_check_branch
          %407 = sbr.rel (%p405) target = $region80
        $region79: #{tpu_custom_call.1} parent=55 // pred_region
          %408 = dma.done [#allocation13], 2048
        $region80: #{tpu_custom_call.1} parent=55 // pred_fallthru
          _
        // Predicated region
        $region81: #{tpu_custom_call.1} parent=55 // pred_check
          %p409 = pneg %p179
        $region82: #{tpu_custom_call.1} parent=55 // pred_check_branch
          %411 = sbr.rel (%p409) target = $region84
        $region83: #{tpu_custom_call.1} parent=55 // pred_region
          %412 = dma.done [#allocation13], 16
        $region84: #{tpu_custom_call.1} parent=55 // pred_fallthru
          _
        // Predicated region
        $region85: #{tpu_custom_call.1} parent=55 // pred_check
          %p413 = pneg %p200
        $region86: #{tpu_custom_call.1} parent=55 // pred_check_branch
          %415 = sbr.rel (%p413) target = $region88
        $region87: #{tpu_custom_call.1} parent=55 // pred_region
          %416 = dma.done [#allocation16], 16
        $region88: #{tpu_custom_call.1} parent=55 // pred_fallthru
          _
        %s417 = sand.u32 %s40, 1
        %s418 = scalar_lea.sflag [#allocation4], %s417
        %s419 = sand.u32 %s40, 1
        %s420 = smul.addr %s419, 64
        %s421 = scalar_lea.vmem [#allocation3], %s420
        %p422 = pneg %p53
        %p423 = pneg %p50
        %p424 = pneg %p74
        %p425 = pneg %p71
        %p426 = pneg %p95
        %p427 = pneg %p92
        %p428 = pneg %p116
        %p429 = pneg %p113
        %p430 = pneg %p137
        %p431 = pneg %p134
        %p432 = pneg %p158
        %p433 = pneg %p155
        %p434 = pneg %p179
        %p435 = pneg %p176
        %p436 = pneg %p200
        %p437 = pneg %p197
        %p438 = pneg %p221
        %p439 = pneg %p218
        %p440 = pneg %p247
        %p441 = pneg %p244
        %s442 = sand.u32 %s234, 1
        %s443 = scalar_lea.sflag [#allocation5], %s442
        %s444 = sand.u32 %s234, 1
        %s445 = scalar_lea.vmem [#allocation17], %s444
        %s446 = smul.u32 16, %s32
        %v448 = vld [vmem:[%s384] sm:$0xf]
        %v449 = vld [vmem:[%s384 + $0x4] sm:$0xf]
        %v450 = vld [vmem:[%s384 + $0x8] sm:$0xf]
        %v451 = vld [vmem:[%s384 + $0xc] sm:$0xf]
        %v452 = vld [vmem:[%s384 + $0x10] sm:$0xf]
        %v453 = vld [vmem:[%s384 + $0x14] sm:$0xf]
        %v454 = vld [vmem:[%s384 + $0x18] sm:$0xf]
        %v455 = vld [vmem:[%s384 + $0x1c] sm:$0xf]
        %v456 = vld [vmem:[%s384 + $0x20] sm:$0xf]
        %v457 = vld [vmem:[%s384 + $0x24] sm:$0xf]
        %v458 = vld [vmem:[%s384 + $0x28] sm:$0xf]
        %v459 = vld [vmem:[%s384 + $0x2c] sm:$0xf]
        %v460 = vld [vmem:[%s384 + $0x30] sm:$0xf]
        %v461 = vld [vmem:[%s384 + $0x34] sm:$0xf]
        %v462 = vld [vmem:[%s384 + $0x38] sm:$0xf]
        %v463 = vld [vmem:[%s384 + $0x3c] sm:$0xf]
        %v464 = vld [vmem:[#allocation6] sm:$0xff]
        %v465 = vld [vmem:[#allocation6 + $0x8] sm:$0xff]
        %v466 = vld [vmem:[#allocation6 + $0x10] sm:$0xff]
        %v467 = vld [vmem:[#allocation6 + $0x18] sm:$0xff]
        %v468 = vld [vmem:[#allocation6 + $0x20] sm:$0xff]
        %v469 = vld [vmem:[#allocation6 + $0x28] sm:$0xff]
        %v470 = vld [vmem:[#allocation6 + $0x30] sm:$0xff]
        %v471 = vld [vmem:[#allocation6 + $0x38] sm:$0xff]
        %v472 = vld [vmem:[#allocation6 + $0x40] sm:$0xff]
        %v473 = vld [vmem:[#allocation6 + $0x48] sm:$0xff]
        %v474 = vld [vmem:[#allocation6 + $0x50] sm:$0xff]
        %v475 = vld [vmem:[#allocation6 + $0x58] sm:$0xff]
        %v476 = vld [vmem:[#allocation6 + $0x60] sm:$0xff]
        %v477 = vld [vmem:[#allocation6 + $0x68] sm:$0xff]
        %v478 = vld [vmem:[#allocation6 + $0x70] sm:$0xff]
        %v479 = vld [vmem:[#allocation6 + $0x78] sm:$0xff]
        %v480 = vld [vmem:[#allocation6 + $0x80] sm:$0xff]
        %v481 = vld [vmem:[#allocation6 + $0x88] sm:$0xff]
        %v482 = vld [vmem:[#allocation6 + $0x90] sm:$0xff]
        %v483 = vld [vmem:[#allocation6 + $0x98] sm:$0xff]
        %v484 = vld [vmem:[#allocation6 + $0xa0] sm:$0xff]
        %v485 = vld [vmem:[#allocation6 + $0xa8] sm:$0xff]
        %v486 = vld [vmem:[#allocation6 + $0xb0] sm:$0xff]
        %v487 = vld [vmem:[#allocation6 + $0xb8] sm:$0xff]
        %v488 = vld [vmem:[#allocation6 + $0xc0] sm:$0xff]
        %v489 = vld [vmem:[#allocation6 + $0xc8] sm:$0xff]
        %v490 = vld [vmem:[#allocation6 + $0xd0] sm:$0xff]
        %v491 = vld [vmem:[#allocation6 + $0xd8] sm:$0xff]
        %v492 = vld [vmem:[#allocation6 + $0xe0] sm:$0xff]
        %v493 = vld [vmem:[#allocation6 + $0xe8] sm:$0xff]
        %v494 = vld [vmem:[#allocation6 + $0xf0] sm:$0xff]
        %v495 = vld [vmem:[#allocation6 + $0xf8] sm:$0xff]
        %v496 = vld [vmem:[#allocation8] sm:$0xf]
        %v498 = vlaneseq
        %v499 = vshrl.u32 %v498, 7
        %v500 = vsub.s32 0, %v499
        %v501 = vrot.slane %v496, %v500
        %v502 = vlaneseq
        %v503 = vshrl.u32 %v502, 7
        %v504 = vsub.s32 1, %v503
        %v505 = vrot.slane %v496, %v504
        %v506 = vlaneseq
        %v507 = vshrl.u32 %v506, 7
        %v508 = vsub.s32 2, %v507
        %v509 = vrot.slane %v496, %v508
        %v510 = vlaneseq
        %v511 = vshrl.u32 %v510, 7
        %v512 = vsub.s32 3, %v511
        %v513 = vrot.slane %v496, %v512
        %v534 = vunpack.c.l.b16 %v448
        %v535 = vunpack.c.l.b16 %v449
        %v536 = vunpack.c.l.b16 %v450
        %v537 = vunpack.c.l.b16 %v451
        %v538 = vunpack.c.l.b16 %v452
        %v539 = vunpack.c.l.b16 %v453
        %v540 = vunpack.c.l.b16 %v454
        %v541 = vunpack.c.l.b16 %v455
        %v542 = vunpack.c.l.b16 %v456
        %v543 = vunpack.c.l.b16 %v457
        %v544 = vunpack.c.l.b16 %v458
        %v545 = vunpack.c.l.b16 %v459
        %v546 = vunpack.c.l.b16 %v460
        %v547 = vunpack.c.l.b16 %v461
        %v548 = vunpack.c.l.b16 %v462
        %v549 = vunpack.c.l.b16 %v463
        %v550 = vpack.c.b16 %v535, %v534
        %v551 = vpack.c.b16 %v537, %v536
        %v552 = vpack.c.b16 %v539, %v538
        %v553 = vpack.c.b16 %v541, %v540
        %v554 = vpack.c.b16 %v543, %v542
        %v555 = vpack.c.b16 %v545, %v544
        %v556 = vpack.c.b16 %v547, %v546
        %v557 = vpack.c.b16 %v549, %v548
        %v598 = vunpack.c.l.b16 %v464
        %v599 = vunpack.c.h.b16 %v464
        %v600 = vunpack.c.l.b16 %v465
        %v601 = vunpack.c.h.b16 %v465
        %v602 = vunpack.c.l.b16 %v466
        %v603 = vunpack.c.h.b16 %v466
        %v604 = vunpack.c.l.b16 %v467
        %v605 = vunpack.c.h.b16 %v467
        %v606 = vunpack.c.l.b16 %v468
        %v607 = vunpack.c.h.b16 %v468
        %v608 = vunpack.c.l.b16 %v469
        %v609 = vunpack.c.h.b16 %v469
        %v610 = vunpack.c.l.b16 %v470
        %v611 = vunpack.c.h.b16 %v470
        %v612 = vunpack.c.l.b16 %v471
        %v613 = vunpack.c.h.b16 %v471
        %v614 = vunpack.c.l.b16 %v472
        %v615 = vunpack.c.h.b16 %v472
        %v616 = vunpack.c.l.b16 %v473
        %v617 = vunpack.c.h.b16 %v473
        %v618 = vunpack.c.l.b16 %v474
        %v619 = vunpack.c.h.b16 %v474
        %v620 = vunpack.c.l.b16 %v475
        %v621 = vunpack.c.h.b16 %v475
        %v622 = vunpack.c.l.b16 %v476
        %v623 = vunpack.c.h.b16 %v476
        %v624 = vunpack.c.l.b16 %v477
        %v625 = vunpack.c.h.b16 %v477
        %v626 = vunpack.c.l.b16 %v478
        %v627 = vunpack.c.h.b16 %v478
        %v628 = vunpack.c.l.b16 %v479
        %v629 = vunpack.c.h.b16 %v479
        %v630 = vunpack.c.l.b16 %v480
        %v631 = vunpack.c.h.b16 %v480
        %v632 = vunpack.c.l.b16 %v481
        %v633 = vunpack.c.h.b16 %v481
        %v634 = vunpack.c.l.b16 %v482
        %v635 = vunpack.c.h.b16 %v482
        %v636 = vunpack.c.l.b16 %v483
        %v637 = vunpack.c.h.b16 %v483
        %v638 = vunpack.c.l.b16 %v484
        %v639 = vunpack.c.h.b16 %v484
        %v640 = vunpack.c.l.b16 %v485
        %v641 = vunpack.c.h.b16 %v485
        %v642 = vunpack.c.l.b16 %v486
        %v643 = vunpack.c.h.b16 %v486
        %v644 = vunpack.c.l.b16 %v487
        %v645 = vunpack.c.h.b16 %v487
        %v646 = vunpack.c.l.b16 %v488
        %v647 = vunpack.c.h.b16 %v488
        %v648 = vunpack.c.l.b16 %v489
        %v649 = vunpack.c.h.b16 %v489
        %v650 = vunpack.c.l.b16 %v490
        %v651 = vunpack.c.h.b16 %v490
        %v652 = vunpack.c.l.b16 %v491
        %v653 = vunpack.c.h.b16 %v491
        %v654 = vunpack.c.l.b16 %v492
        %v655 = vunpack.c.h.b16 %v492
        %v656 = vunpack.c.l.b16 %v493
        %v657 = vunpack.c.h.b16 %v493
        %v658 = vunpack.c.l.b16 %v494
        %v659 = vunpack.c.h.b16 %v494
        %v660 = vunpack.c.l.b16 %v495
        %v661 = vunpack.c.h.b16 %v495
        %v662 = vpack.c.b16 %v602, %v598
        %v663 = vpack.c.b16 %v603, %v599
        %v664 = vpack.c.b16 %v604, %v600
        %v665 = vpack.c.b16 %v605, %v601
        %v666 = vpack.c.b16 %v610, %v606
        %v667 = vpack.c.b16 %v611, %v607
        %v668 = vpack.c.b16 %v612, %v608
        %v669 = vpack.c.b16 %v613, %v609
        %v670 = vpack.c.b16 %v618, %v614
        %v671 = vpack.c.b16 %v619, %v615
        %v672 = vpack.c.b16 %v620, %v616
        %v673 = vpack.c.b16 %v621, %v617
        %v674 = vpack.c.b16 %v626, %v622
        %v675 = vpack.c.b16 %v627, %v623
        %v676 = vpack.c.b16 %v628, %v624
        %v677 = vpack.c.b16 %v629, %v625
        %v678 = vpack.c.b16 %v634, %v630
        %v679 = vpack.c.b16 %v635, %v631
        %v680 = vpack.c.b16 %v636, %v632
        %v681 = vpack.c.b16 %v637, %v633
        %v682 = vpack.c.b16 %v642, %v638
        %v683 = vpack.c.b16 %v643, %v639
        %v684 = vpack.c.b16 %v644, %v640
        %v685 = vpack.c.b16 %v645, %v641
        %v686 = vpack.c.b16 %v650, %v646
        %v687 = vpack.c.b16 %v651, %v647
        %v688 = vpack.c.b16 %v652, %v648
        %v689 = vpack.c.b16 %v653, %v649
        %v690 = vpack.c.b16 %v658, %v654
        %v691 = vpack.c.b16 %v659, %v655
        %v692 = vpack.c.b16 %v660, %v656
        %v693 = vpack.c.b16 %v661, %v657
        %726 = vmatprep.subr.bf16.mxu0 %v663
        %727 = vmatpush1.bf16.msra.mxu0 %v662
        %728 = vmatprep.subr.bf16.mxu0 %v667
        %729 = vmatpush1.bf16.msra.mxu0 %v666
        %730 = vmatprep.subr.bf16.mxu0 %v671
        %731 = vmatpush1.bf16.msra.mxu0 %v670
        %732 = vmatprep.subr.bf16.mxu0 %v675
        %733 = vmatpush1.bf16.msra.mxu0 %v674
        %734 = vmatprep.subr.bf16.mxu0 %v679
        %735 = vmatpush1.bf16.msra.mxu0 %v678
        %736 = vmatprep.subr.bf16.mxu0 %v683
        %737 = vmatpush1.bf16.msra.mxu0 %v682
        %738 = vmatprep.subr.bf16.mxu0 %v687
        %739 = vmatpush1.bf16.msra.mxu0 %v686
        %740 = vmatprep.subr.bf16.mxu0 %v691
        %741 = vmatpush1.bf16.msra.mxu0 %v690
        %742 = vmatprep.subr.bf16.mxu0 0
        %743 = vmatpush1.bf16.msra.mxu0 0
        %744 = vmatprep.subr.bf16.mxu0 0
        %745 = vmatpush1.bf16.msra.mxu0 0
        %746 = vmatprep.subr.bf16.mxu0 0
        %747 = vmatpush1.bf16.msra.mxu0 0
        %748 = vmatprep.subr.bf16.mxu0 0
        %749 = vmatpush1.bf16.msra.mxu0 0
        %750 = vmatprep.subr.bf16.mxu0 0
        %751 = vmatpush1.bf16.msra.mxu0 0
        %752 = vmatprep.subr.bf16.mxu0 0
        %753 = vmatpush1.bf16.msra.mxu0 0
        %754 = vmatprep.subr.bf16.mxu0 0
        %755 = vmatpush1.bf16.msra.mxu0 0
        %756 = vmatprep.subr.bf16.mxu0 0
        %757 = vmatpush1.bf16.msra.mxu0 0
        %758 = vmatprep.mubr.bf16.mxu0 0
        %759 = vmatmul.mubr.bf16.gmra.mrb[0].mxu0 %v550
        %v760 = vpop.f32.mrb[0].mxu0
        %v761 = vadd.f32 %v501, %v760
        %v762 = vpop.f32.mrb[0].mxu0
        %v763 = vadd.f32 %v505, %v762
        %v764 = vpop.f32.mrb[0].mxu0
        %v765 = vadd.f32 %v501, %v764
        %v766 = vpop.f32.mrb[0].mxu0
        %v767 = vadd.f32 %v505, %v766
        %768 = vmatprep.mubr.bf16.mxu0 0
        %769 = vmatmul.mubr.bf16.gmra.mrb[0].mxu0 %v551
        %v770 = vpop.f32.mrb[0].mxu0
        %v771 = vadd.f32 %v501, %v770
        %v772 = vpop.f32.mrb[0].mxu0
        %v773 = vadd.f32 %v505, %v772
        %v774 = vpop.f32.mrb[0].mxu0
        %v775 = vadd.f32 %v501, %v774
        %v776 = vpop.f32.mrb[0].mxu0
        %v777 = vadd.f32 %v505, %v776
        %778 = vmatprep.mubr.bf16.mxu0 0
        %779 = vmatmul.mubr.bf16.gmra.mrb[0].mxu0 %v552
        %v780 = vpop.f32.mrb[0].mxu0
        %v781 = vadd.f32 %v501, %v780
        %v782 = vpop.f32.mrb[0].mxu0
        %v783 = vadd.f32 %v505, %v782
        %v784 = vpop.f32.mrb[0].mxu0
        %v785 = vadd.f32 %v501, %v784
        %v786 = vpop.f32.mrb[0].mxu0
        %v787 = vadd.f32 %v505, %v786
        %788 = vmatprep.mubr.bf16.mxu0 0
        %789 = vmatmul.mubr.bf16.gmra.mrb[0].mxu0 %v553
        %v790 = vpop.f32.mrb[0].mxu0
        %v791 = vadd.f32 %v501, %v790
        %v792 = vpop.f32.mrb[0].mxu0
        %v793 = vadd.f32 %v505, %v792
        %v794 = vpop.f32.mrb[0].mxu0
        %v795 = vadd.f32 %v501, %v794
        %v796 = vpop.f32.mrb[0].mxu0
        %v797 = vadd.f32 %v505, %v796
        %798 = vmatprep.mubr.bf16.mxu0 0
        %799 = vmatmul.mubr.bf16.gmra.mrb[0].mxu0 %v554
        %v800 = vpop.f32.mrb[0].mxu0
        %v801 = vadd.f32 %v501, %v800
        %v802 = vpop.f32.mrb[0].mxu0
        %v803 = vadd.f32 %v505, %v802
        %v804 = vpop.f32.mrb[0].mxu0
        %v805 = vadd.f32 %v501, %v804
        %v806 = vpop.f32.mrb[0].mxu0
        %v807 = vadd.f32 %v505, %v806
        %808 = vmatprep.mubr.bf16.mxu0 0
        %809 = vmatmul.mubr.bf16.gmra.mrb[0].mxu0 %v555
        %v810 = vpop.f32.mrb[0].mxu0
        %v811 = vadd.f32 %v501, %v810
        %v812 = vpop.f32.mrb[0].mxu0
        %v813 = vadd.f32 %v505, %v812
        %v814 = vpop.f32.mrb[0].mxu0
        %v815 = vadd.f32 %v501, %v814
        %v816 = vpop.f32.mrb[0].mxu0
        %v817 = vadd.f32 %v505, %v816
        %818 = vmatprep.mubr.bf16.mxu0 0
        %819 = vmatmul.mubr.bf16.gmra.mrb[0].mxu0 %v556
        %v820 = vpop.f32.mrb[0].mxu0
        %v821 = vadd.f32 %v501, %v820
        %v822 = vpop.f32.mrb[0].mxu0
        %v823 = vadd.f32 %v505, %v822
        %v824 = vpop.f32.mrb[0].mxu0
        %v825 = vadd.f32 %v501, %v824
        %v826 = vpop.f32.mrb[0].mxu0
        %v827 = vadd.f32 %v505, %v826
        %828 = vmatprep.mubr.bf16.mxu0 0
        %829 = vmatmul.mubr.bf16.gmra.mrb[0].mxu0 %v557
        %v830 = vpop.f32.mrb[0].mxu0
        %v831 = vadd.f32 %v501, %v830
        %v832 = vpop.f32.mrb[0].mxu0
        %v833 = vadd.f32 %v505, %v832
        %v834 = vpop.f32.mrb[0].mxu0
        %v835 = vadd.f32 %v501, %v834
        %v836 = vpop.f32.mrb[0].mxu0
        %v837 = vadd.f32 %v505, %v836
        %838 = vdwg.mxu0
        %839 = vmatprep.subr.bf16.mxu0 %v665
        %840 = vmatpush1.bf16.msra.mxu0 %v664
        %841 = vmatprep.subr.bf16.mxu0 %v669
        %842 = vmatpush1.bf16.msra.mxu0 %v668
        %843 = vmatprep.subr.bf16.mxu0 %v673
        %844 = vmatpush1.bf16.msra.mxu0 %v672
        %845 = vmatprep.subr.bf16.mxu0 %v677
        %846 = vmatpush1.bf16.msra.mxu0 %v676
        %847 = vmatprep.subr.bf16.mxu0 %v681
        %848 = vmatpush1.bf16.msra.mxu0 %v680
        %849 = vmatprep.subr.bf16.mxu0 %v685
        %850 = vmatpush1.bf16.msra.mxu0 %v684
        %851 = vmatprep.subr.bf16.mxu0 %v689
        %852 = vmatpush1.bf16.msra.mxu0 %v688
        %853 = vmatprep.subr.bf16.mxu0 %v693
        %854 = vmatpush1.bf16.msra.mxu0 %v692
        %855 = vmatprep.subr.bf16.mxu0 0
        %856 = vmatpush1.bf16.msra.mxu0 0
        %857 = vmatprep.subr.bf16.mxu0 0
        %858 = vmatpush1.bf16.msra.mxu0 0
        %859 = vmatprep.subr.bf16.mxu0 0
        %860 = vmatpush1.bf16.msra.mxu0 0
        %861 = vmatprep.subr.bf16.mxu0 0
        %862 = vmatpush1.bf16.msra.mxu0 0
        %863 = vmatprep.subr.bf16.mxu0 0
        %864 = vmatpush1.bf16.msra.mxu0 0
        %865 = vmatprep.subr.bf16.mxu0 0
        %866 = vmatpush1.bf16.msra.mxu0 0
        %867 = vmatprep.subr.bf16.mxu0 0
        %868 = vmatpush1.bf16.msra.mxu0 0
        %869 = vmatprep.subr.bf16.mxu0 0
        %870 = vmatpush1.bf16.msra.mxu0 0
        %871 = vmatprep.mubr.bf16.mxu0 0
        %872 = vmatmul.mubr.bf16.gmra.mrb[0].mxu0 %v550
        %v873 = vpop.f32.mrb[0].mxu0
        %v874 = vadd.f32 %v509, %v873
        %v875 = vpop.f32.mrb[0].mxu0
        %v876 = vadd.f32 %v513, %v875
        %v877 = vpop.f32.mrb[0].mxu0
        %v878 = vadd.f32 %v509, %v877
        %v879 = vpop.f32.mrb[0].mxu0
        %v880 = vadd.f32 %v513, %v879
        %881 = vmatprep.mubr.bf16.mxu0 0
        %882 = vmatmul.mubr.bf16.gmra.mrb[0].mxu0 %v551
        %v883 = vpop.f32.mrb[0].mxu0
        %v884 = vadd.f32 %v509, %v883
        %v885 = vpop.f32.mrb[0].mxu0
        %v886 = vadd.f32 %v513, %v885
        %v887 = vpop.f32.mrb[0].mxu0
        %v888 = vadd.f32 %v509, %v887
        %v889 = vpop.f32.mrb[0].mxu0
        %v890 = vadd.f32 %v513, %v889
        %891 = vmatprep.mubr.bf16.mxu0 0
        %892 = vmatmul.mubr.bf16.gmra.mrb[0].mxu0 %v552
        %v893 = vpop.f32.mrb[0].mxu0
        %v894 = vadd.f32 %v509, %v893
        %v895 = vpop.f32.mrb[0].mxu0
        %v896 = vadd.f32 %v513, %v895
        %v897 = vpop.f32.mrb[0].mxu0
        %v898 = vadd.f32 %v509, %v897
        %v899 = vpop.f32.mrb[0].mxu0
        %v900 = vadd.f32 %v513, %v899
        %901 = vmatprep.mubr.bf16.mxu0 0
        %902 = vmatmul.mubr.bf16.gmra.mrb[0].mxu0 %v553
        %v903 = vpop.f32.mrb[0].mxu0
        %v904 = vadd.f32 %v509, %v903
        %v905 = vpop.f32.mrb[0].mxu0
        %v906 = vadd.f32 %v513, %v905
        %v907 = vpop.f32.mrb[0].mxu0
        %v908 = vadd.f32 %v509, %v907
        %v909 = vpop.f32.mrb[0].mxu0
        %v910 = vadd.f32 %v513, %v909
        %911 = vmatprep.mubr.bf16.mxu0 0
        %912 = vmatmul.mubr.bf16.gmra.mrb[0].mxu0 %v554
        %v913 = vpop.f32.mrb[0].mxu0
        %v914 = vadd.f32 %v509, %v913
        %v915 = vpop.f32.mrb[0].mxu0
        %v916 = vadd.f32 %v513, %v915
        %v917 = vpop.f32.mrb[0].mxu0
        %v918 = vadd.f32 %v509, %v917
        %v919 = vpop.f32.mrb[0].mxu0
        %v920 = vadd.f32 %v513, %v919
        %921 = vmatprep.mubr.bf16.mxu0 0
        %922 = vmatmul.mubr.bf16.gmra.mrb[0].mxu0 %v555
        %v923 = vpop.f32.mrb[0].mxu0
        %v924 = vadd.f32 %v509, %v923
        %v925 = vpop.f32.mrb[0].mxu0
        %v926 = vadd.f32 %v513, %v925
        %v927 = vpop.f32.mrb[0].mxu0
        %v928 = vadd.f32 %v509, %v927
        %v929 = vpop.f32.mrb[0].mxu0
        %v930 = vadd.f32 %v513, %v929
        %931 = vmatprep.mubr.bf16.mxu0 0
        %932 = vmatmul.mubr.bf16.gmra.mrb[0].mxu0 %v556
        %v933 = vpop.f32.mrb[0].mxu0
        %v934 = vadd.f32 %v509, %v933
        %v935 = vpop.f32.mrb[0].mxu0
        %v936 = vadd.f32 %v513, %v935
        %v937 = vpop.f32.mrb[0].mxu0
        %v938 = vadd.f32 %v509, %v937
        %v939 = vpop.f32.mrb[0].mxu0
        %v940 = vadd.f32 %v513, %v939
        %941 = vmatprep.mubr.bf16.mxu0 0
        %942 = vmatmul.mubr.bf16.gmra.mrb[0].mxu0 %v557
        %v943 = vpop.f32.mrb[0].mxu0
        %v944 = vadd.f32 %v509, %v943
        %v945 = vpop.f32.mrb[0].mxu0
        %v946 = vadd.f32 %v513, %v945
        %v947 = vpop.f32.mrb[0].mxu0
        %v948 = vadd.f32 %v509, %v947
        %v949 = vpop.f32.mrb[0].mxu0
        %v950 = vadd.f32 %v513, %v949
        %951 = vdwg.mxu0
        %vm952 = vcmp.gt.f32.partialorder %v761, 0.0
        %vm953 = vcmp.gt.f32.partialorder %v763, 0.0
        %vm954 = vcmp.gt.f32.partialorder %v874, 0.0
        %vm955 = vcmp.gt.f32.partialorder %v876, 0.0
        %vm956 = vcmp.gt.f32.partialorder %v765, 0.0
        %vm957 = vcmp.gt.f32.partialorder %v767, 0.0
        %vm958 = vcmp.gt.f32.partialorder %v878, 0.0
        %vm959 = vcmp.gt.f32.partialorder %v880, 0.0
        %vm960 = vcmp.gt.f32.partialorder %v771, 0.0
        %vm961 = vcmp.gt.f32.partialorder %v773, 0.0
        %vm962 = vcmp.gt.f32.partialorder %v884, 0.0
        %vm963 = vcmp.gt.f32.partialorder %v886, 0.0
        %vm964 = vcmp.gt.f32.partialorder %v775, 0.0
        %vm965 = vcmp.gt.f32.partialorder %v777, 0.0
        %vm966 = vcmp.gt.f32.partialorder %v888, 0.0
        %vm967 = vcmp.gt.f32.partialorder %v890, 0.0
        %vm968 = vcmp.gt.f32.partialorder %v781, 0.0
        %vm969 = vcmp.gt.f32.partialorder %v783, 0.0
        %vm970 = vcmp.gt.f32.partialorder %v894, 0.0
        %vm971 = vcmp.gt.f32.partialorder %v896, 0.0
        %vm972 = vcmp.gt.f32.partialorder %v785, 0.0
        %vm973 = vcmp.gt.f32.partialorder %v787, 0.0
        %vm974 = vcmp.gt.f32.partialorder %v898, 0.0
        %vm975 = vcmp.gt.f32.partialorder %v900, 0.0
        %vm976 = vcmp.gt.f32.partialorder %v791, 0.0
        %vm977 = vcmp.gt.f32.partialorder %v793, 0.0
        %vm978 = vcmp.gt.f32.partialorder %v904, 0.0
        %vm979 = vcmp.gt.f32.partialorder %v906, 0.0
        %vm980 = vcmp.gt.f32.partialorder %v795, 0.0
        %vm981 = vcmp.gt.f32.partialorder %v797, 0.0
        %vm982 = vcmp.gt.f32.partialorder %v908, 0.0
        %vm983 = vcmp.gt.f32.partialorder %v910, 0.0
        %vm984 = vcmp.gt.f32.partialorder %v801, 0.0
        %vm985 = vcmp.gt.f32.partialorder %v803, 0.0
        %vm986 = vcmp.gt.f32.partialorder %v914, 0.0
        %vm987 = vcmp.gt.f32.partialorder %v916, 0.0
        %vm988 = vcmp.gt.f32.partialorder %v805, 0.0
        %vm989 = vcmp.gt.f32.partialorder %v807, 0.0
        %vm990 = vcmp.gt.f32.partialorder %v918, 0.0
        %vm991 = vcmp.gt.f32.partialorder %v920, 0.0
        %vm992 = vcmp.gt.f32.partialorder %v811, 0.0
        %vm993 = vcmp.gt.f32.partialorder %v813, 0.0
        %vm994 = vcmp.gt.f32.partialorder %v924, 0.0
        %vm995 = vcmp.gt.f32.partialorder %v926, 0.0
        %vm996 = vcmp.gt.f32.partialorder %v815, 0.0
        %vm997 = vcmp.gt.f32.partialorder %v817, 0.0
        %vm998 = vcmp.gt.f32.partialorder %v928, 0.0
        %vm999 = vcmp.gt.f32.partialorder %v930, 0.0
        %vm1000 = vcmp.gt.f32.partialorder %v821, 0.0
        %vm1001 = vcmp.gt.f32.partialorder %v823, 0.0
        %vm1002 = vcmp.gt.f32.partialorder %v934, 0.0
        %vm1003 = vcmp.gt.f32.partialorder %v936, 0.0
        %vm1004 = vcmp.gt.f32.partialorder %v825, 0.0
        %vm1005 = vcmp.gt.f32.partialorder %v827, 0.0
        %vm1006 = vcmp.gt.f32.partialorder %v938, 0.0
        %vm1007 = vcmp.gt.f32.partialorder %v940, 0.0
        %vm1008 = vcmp.gt.f32.partialorder %v831, 0.0
        %vm1009 = vcmp.gt.f32.partialorder %v833, 0.0
        %vm1010 = vcmp.gt.f32.partialorder %v944, 0.0
        %vm1011 = vcmp.gt.f32.partialorder %v946, 0.0
        %vm1012 = vcmp.gt.f32.partialorder %v835, 0.0
        %vm1013 = vcmp.gt.f32.partialorder %v837, 0.0
        %vm1014 = vcmp.gt.f32.partialorder %v948, 0.0
        %vm1015 = vcmp.gt.f32.partialorder %v950, 0.0
        %v1016 = vmul.f32 %v761, 0.2
        %v1017 = vmul.f32 %v763, 0.2
        %v1018 = vmul.f32 %v874, 0.2
        %v1019 = vmul.f32 %v876, 0.2
        %v1020 = vmul.f32 %v765, 0.2
        %v1021 = vmul.f32 %v767, 0.2
        %v1022 = vmul.f32 %v878, 0.2
        %v1023 = vmul.f32 %v880, 0.2
        %v1024 = vmul.f32 %v771, 0.2
        %v1025 = vmul.f32 %v773, 0.2
        %v1026 = vmul.f32 %v884, 0.2
        %v1027 = vmul.f32 %v886, 0.2
        %v1028 = vmul.f32 %v775, 0.2
        %v1029 = vmul.f32 %v777, 0.2
        %v1030 = vmul.f32 %v888, 0.2
        %v1031 = vmul.f32 %v890, 0.2
        %v1032 = vmul.f32 %v781, 0.2
        %v1033 = vmul.f32 %v783, 0.2
        %v1034 = vmul.f32 %v894, 0.2
        %v1035 = vmul.f32 %v896, 0.2
        %v1036 = vmul.f32 %v785, 0.2
        %v1037 = vmul.f32 %v787, 0.2
        %v1038 = vmul.f32 %v898, 0.2
        %v1039 = vmul.f32 %v900, 0.2
        %v1040 = vmul.f32 %v791, 0.2
        %v1041 = vmul.f32 %v793, 0.2
        %v1042 = vmul.f32 %v904, 0.2
        %v1043 = vmul.f32 %v906, 0.2
        %v1044 = vmul.f32 %v795, 0.2
        %v1045 = vmul.f32 %v797, 0.2
        %v1046 = vmul.f32 %v908, 0.2
        %v1047 = vmul.f32 %v910, 0.2
        %v1048 = vmul.f32 %v801, 0.2
        %v1049 = vmul.f32 %v803, 0.2
        %v1050 = vmul.f32 %v914, 0.2
        %v1051 = vmul.f32 %v916, 0.2
        %v1052 = vmul.f32 %v805, 0.2
        %v1053 = vmul.f32 %v807, 0.2
        %v1054 = vmul.f32 %v918, 0.2
        %v1055 = vmul.f32 %v920, 0.2
        %v1056 = vmul.f32 %v811, 0.2
        %v1057 = vmul.f32 %v813, 0.2
        %v1058 = vmul.f32 %v924, 0.2
        %v1059 = vmul.f32 %v926, 0.2
        %v1060 = vmul.f32 %v815, 0.2
        %v1061 = vmul.f32 %v817, 0.2
        %v1062 = vmul.f32 %v928, 0.2
        %v1063 = vmul.f32 %v930, 0.2
        %v1064 = vmul.f32 %v821, 0.2
        %v1065 = vmul.f32 %v823, 0.2
        %v1066 = vmul.f32 %v934, 0.2
        %v1067 = vmul.f32 %v936, 0.2
        %v1068 = vmul.f32 %v825, 0.2
        %v1069 = vmul.f32 %v827, 0.2
        %v1070 = vmul.f32 %v938, 0.2
        %v1071 = vmul.f32 %v940, 0.2
        %v1072 = vmul.f32 %v831, 0.2
        %v1073 = vmul.f32 %v833, 0.2
        %v1074 = vmul.f32 %v944, 0.2
        %v1075 = vmul.f32 %v946, 0.2
        %v1076 = vmul.f32 %v835, 0.2
        %v1077 = vmul.f32 %v837, 0.2
        %v1078 = vmul.f32 %v948, 0.2
        %v1079 = vmul.f32 %v950, 0.2
        %v1080 = vsel %vm952, %v761, %v1016
        %v1081 = vsel %vm953, %v763, %v1017
        %v1082 = vsel %vm954, %v874, %v1018
        %v1083 = vsel %vm955, %v876, %v1019
        %v1084 = vsel %vm956, %v765, %v1020
        %v1085 = vsel %vm957, %v767, %v1021
        %v1086 = vsel %vm958, %v878, %v1022
        %v1087 = vsel %vm959, %v880, %v1023
        %v1088 = vsel %vm960, %v771, %v1024
        %v1089 = vsel %vm961, %v773, %v1025
        %v1090 = vsel %vm962, %v884, %v1026
        %v1091 = vsel %vm963, %v886, %v1027
        %v1092 = vsel %vm964, %v775, %v1028
        %v1093 = vsel %vm965, %v777, %v1029
        %v1094 = vsel %vm966, %v888, %v1030
        %v1095 = vsel %vm967, %v890, %v1031
        %v1096 = vsel %vm968, %v781, %v1032
        %v1097 = vsel %vm969, %v783, %v1033
        %v1098 = vsel %vm970, %v894, %v1034
        %v1099 = vsel %vm971, %v896, %v1035
        %v1100 = vsel %vm972, %v785, %v1036
        %v1101 = vsel %vm973, %v787, %v1037
        %v1102 = vsel %vm974, %v898, %v1038
        %v1103 = vsel %vm975, %v900, %v1039
        %v1104 = vsel %vm976, %v791, %v1040
        %v1105 = vsel %vm977, %v793, %v1041
        %v1106 = vsel %vm978, %v904, %v1042
        %v1107 = vsel %vm979, %v906, %v1043
        %v1108 = vsel %vm980, %v795, %v1044
        %v1109 = vsel %vm981, %v797, %v1045
        %v1110 = vsel %vm982, %v908, %v1046
        %v1111 = vsel %vm983, %v910, %v1047
        %v1112 = vsel %vm984, %v801, %v1048
        %v1113 = vsel %vm985, %v803, %v1049
        %v1114 = vsel %vm986, %v914, %v1050
        %v1115 = vsel %vm987, %v916, %v1051
        %v1116 = vsel %vm988, %v805, %v1052
        %v1117 = vsel %vm989, %v807, %v1053
        %v1118 = vsel %vm990, %v918, %v1054
        %v1119 = vsel %vm991, %v920, %v1055
        %v1120 = vsel %vm992, %v811, %v1056
        %v1121 = vsel %vm993, %v813, %v1057
        %v1122 = vsel %vm994, %v924, %v1058
        %v1123 = vsel %vm995, %v926, %v1059
        %v1124 = vsel %vm996, %v815, %v1060
        %v1125 = vsel %vm997, %v817, %v1061
        %v1126 = vsel %vm998, %v928, %v1062
        %v1127 = vsel %vm999, %v930, %v1063
        %v1128 = vsel %vm1000, %v821, %v1064
        %v1129 = vsel %vm1001, %v823, %v1065
        %v1130 = vsel %vm1002, %v934, %v1066
        %v1131 = vsel %vm1003, %v936, %v1067
        %v1132 = vsel %vm1004, %v825, %v1068
        %v1133 = vsel %vm1005, %v827, %v1069
        %v1134 = vsel %vm1006, %v938, %v1070
        %v1135 = vsel %vm1007, %v940, %v1071
        %v1136 = vsel %vm1008, %v831, %v1072
        %v1137 = vsel %vm1009, %v833, %v1073
        %v1138 = vsel %vm1010, %v944, %v1074
        %v1139 = vsel %vm1011, %v946, %v1075
        %v1140 = vsel %vm1012, %v835, %v1076
        %v1141 = vsel %vm1013, %v837, %v1077
        %v1142 = vsel %vm1014, %v948, %v1078
        %v1143 = vsel %vm1015, %v950, %v1079
        %v1144 = vpack.c.bf16 %v1084, %v1080
        %v1145 = vpack.c.bf16 %v1085, %v1081
        %v1146 = vpack.c.bf16 %v1086, %v1082
        %v1147 = vpack.c.bf16 %v1087, %v1083
        %v1148 = vpack.c.bf16 %v1092, %v1088
        %v1149 = vpack.c.bf16 %v1093, %v1089
        %v1150 = vpack.c.bf16 %v1094, %v1090
        %v1151 = vpack.c.bf16 %v1095, %v1091
        %v1152 = vpack.c.bf16 %v1100, %v1096
        %v1153 = vpack.c.bf16 %v1101, %v1097
        %v1154 = vpack.c.bf16 %v1102, %v1098
        %v1155 = vpack.c.bf16 %v1103, %v1099
        %v1156 = vpack.c.bf16 %v1108, %v1104
        %v1157 = vpack.c.bf16 %v1109, %v1105
        %v1158 = vpack.c.bf16 %v1110, %v1106
        %v1159 = vpack.c.bf16 %v1111, %v1107
        %v1160 = vpack.c.bf16 %v1116, %v1112
        %v1161 = vpack.c.bf16 %v1117, %v1113
        %v1162 = vpack.c.bf16 %v1118, %v1114
        %v1163 = vpack.c.bf16 %v1119, %v1115
        %v1164 = vpack.c.bf16 %v1124, %v1120
        %v1165 = vpack.c.bf16 %v1125, %v1121
        %v1166 = vpack.c.bf16 %v1126, %v1122
        %v1167 = vpack.c.bf16 %v1127, %v1123
        %v1168 = vpack.c.bf16 %v1132, %v1128
        %v1169 = vpack.c.bf16 %v1133, %v1129
        %v1170 = vpack.c.bf16 %v1134, %v1130
        %v1171 = vpack.c.bf16 %v1135, %v1131
        %v1172 = vpack.c.bf16 %v1140, %v1136
        %v1173 = vpack.c.bf16 %v1141, %v1137
        %v1174 = vpack.c.bf16 %v1142, %v1138
        %v1175 = vpack.c.bf16 %v1143, %v1139
        %v1176 = vld [vmem:[#allocation9] sm:$0xff]
        %v1177 = vld [vmem:[#allocation9 + $0x8] sm:$0xff]
        %v1178 = vld [vmem:[#allocation9 + $0x10] sm:$0xff]
        %v1179 = vld [vmem:[#allocation9 + $0x18] sm:$0xff]
        %v1180 = vld [vmem:[#allocation9 + $0x20] sm:$0xff]
        %v1181 = vld [vmem:[#allocation9 + $0x28] sm:$0xff]
        %v1182 = vld [vmem:[#allocation9 + $0x30] sm:$0xff]
        %v1183 = vld [vmem:[#allocation9 + $0x38] sm:$0xff]
        %v1184 = vld [vmem:[#allocation9 + $0x40] sm:$0xff]
        %v1185 = vld [vmem:[#allocation9 + $0x48] sm:$0xff]
        %v1186 = vld [vmem:[#allocation9 + $0x50] sm:$0xff]
        %v1187 = vld [vmem:[#allocation9 + $0x58] sm:$0xff]
        %v1188 = vld [vmem:[#allocation9 + $0x60] sm:$0xff]
        %v1189 = vld [vmem:[#allocation9 + $0x68] sm:$0xff]
        %v1190 = vld [vmem:[#allocation9 + $0x70] sm:$0xff]
        %v1191 = vld [vmem:[#allocation9 + $0x78] sm:$0xff]
        %v1192 = vld [vmem:[#allocation9 + $0x80] sm:$0xff]
        %v1193 = vld [vmem:[#allocation9 + $0x88] sm:$0xff]
        %v1194 = vld [vmem:[#allocation9 + $0x90] sm:$0xff]
        %v1195 = vld [vmem:[#allocation9 + $0x98] sm:$0xff]
        %v1196 = vld [vmem:[#allocation9 + $0xa0] sm:$0xff]
        %v1197 = vld [vmem:[#allocation9 + $0xa8] sm:$0xff]
        %v1198 = vld [vmem:[#allocation9 + $0xb0] sm:$0xff]
        %v1199 = vld [vmem:[#allocation9 + $0xb8] sm:$0xff]
        %v1200 = vld [vmem:[#allocation9 + $0xc0] sm:$0xff]
        %v1201 = vld [vmem:[#allocation9 + $0xc8] sm:$0xff]
        %v1202 = vld [vmem:[#allocation9 + $0xd0] sm:$0xff]
        %v1203 = vld [vmem:[#allocation9 + $0xd8] sm:$0xff]
        %v1204 = vld [vmem:[#allocation9 + $0xe0] sm:$0xff]
        %v1205 = vld [vmem:[#allocation9 + $0xe8] sm:$0xff]
        %v1206 = vld [vmem:[#allocation9 + $0xf0] sm:$0xff]
        %v1207 = vld [vmem:[#allocation9 + $0xf8] sm:$0xff]
        %v1208 = vld [vmem:[#allocation9 + $0x100] sm:$0xff]
        %v1209 = vld [vmem:[#allocation9 + $0x108] sm:$0xff]
        %v1210 = vld [vmem:[#allocation9 + $0x110] sm:$0xff]
        %v1211 = vld [vmem:[#allocation9 + $0x118] sm:$0xff]
        %v1212 = vld [vmem:[#allocation9 + $0x120] sm:$0xff]
        %v1213 = vld [vmem:[#allocation9 + $0x128] sm:$0xff]
        %v1214 = vld [vmem:[#allocation9 + $0x130] sm:$0xff]
        %v1215 = vld [vmem:[#allocation9 + $0x138] sm:$0xff]
        %v1216 = vld [vmem:[#allocation9 + $0x140] sm:$0xff]
        %v1217 = vld [vmem:[#allocation9 + $0x148] sm:$0xff]
        %v1218 = vld [vmem:[#allocation9 + $0x150] sm:$0xff]
        %v1219 = vld [vmem:[#allocation9 + $0x158] sm:$0xff]
        %v1220 = vld [vmem:[#allocation9 + $0x160] sm:$0xff]
        %v1221 = vld [vmem:[#allocation9 + $0x168] sm:$0xff]
        %v1222 = vld [vmem:[#allocation9 + $0x170] sm:$0xff]
        %v1223 = vld [vmem:[#allocation9 + $0x178] sm:$0xff]
        %v1224 = vld [vmem:[#allocation9 + $0x180] sm:$0xff]
        %v1225 = vld [vmem:[#allocation9 + $0x188] sm:$0xff]
        %v1226 = vld [vmem:[#allocation9 + $0x190] sm:$0xff]
        %v1227 = vld [vmem:[#allocation9 + $0x198] sm:$0xff]
        %v1228 = vld [vmem:[#allocation9 + $0x1a0] sm:$0xff]
        %v1229 = vld [vmem:[#allocation9 + $0x1a8] sm:$0xff]
        %v1230 = vld [vmem:[#allocation9 + $0x1b0] sm:$0xff]
        %v1231 = vld [vmem:[#allocation9 + $0x1b8] sm:$0xff]
        %v1232 = vld [vmem:[#allocation9 + $0x1c0] sm:$0xff]
        %v1233 = vld [vmem:[#allocation9 + $0x1c8] sm:$0xff]
        %v1234 = vld [vmem:[#allocation9 + $0x1d0] sm:$0xff]
        %v1235 = vld [vmem:[#allocation9 + $0x1d8] sm:$0xff]
        %v1236 = vld [vmem:[#allocation9 + $0x1e0] sm:$0xff]
        %v1237 = vld [vmem:[#allocation9 + $0x1e8] sm:$0xff]
        %v1238 = vld [vmem:[#allocation9 + $0x1f0] sm:$0xff]
        %v1239 = vld [vmem:[#allocation9 + $0x1f8] sm:$0xff]
        %v1240 = vld [vmem:[#allocation11] sm:$0x3]
        %v1242 = vlaneseq
        %v1243 = vshrl.u32 %v1242, 7
        %v1244 = vsub.s32 0, %v1243
        %v1245 = vrot.slane %v1240, %v1244
        %v1246 = vlaneseq
        %v1247 = vshrl.u32 %v1246, 7
        %v1248 = vsub.s32 1, %v1247
        %v1249 = vrot.slane %v1240, %v1248
        %v1316 = vunpack.c.l.b16 %v1176
        %v1317 = vunpack.c.h.b16 %v1176
        %v1318 = vunpack.c.l.b16 %v1177
        %v1319 = vunpack.c.h.b16 %v1177
        %v1320 = vunpack.c.l.b16 %v1178
        %v1321 = vunpack.c.h.b16 %v1178
        %v1322 = vunpack.c.l.b16 %v1179
        %v1323 = vunpack.c.h.b16 %v1179
        %v1324 = vunpack.c.l.b16 %v1180
        %v1325 = vunpack.c.h.b16 %v1180
        %v1326 = vunpack.c.l.b16 %v1181
        %v1327 = vunpack.c.h.b16 %v1181
        %v1328 = vunpack.c.l.b16 %v1182
        %v1329 = vunpack.c.h.b16 %v1182
        %v1330 = vunpack.c.l.b16 %v1183
        %v1331 = vunpack.c.h.b16 %v1183
        %v1332 = vunpack.c.l.b16 %v1184
        %v1333 = vunpack.c.h.b16 %v1184
        %v1334 = vunpack.c.l.b16 %v1185
        %v1335 = vunpack.c.h.b16 %v1185
        %v1336 = vunpack.c.l.b16 %v1186
        %v1337 = vunpack.c.h.b16 %v1186
        %v1338 = vunpack.c.l.b16 %v1187
        %v1339 = vunpack.c.h.b16 %v1187
        %v1340 = vunpack.c.l.b16 %v1188
        %v1341 = vunpack.c.h.b16 %v1188
        %v1342 = vunpack.c.l.b16 %v1189
        %v1343 = vunpack.c.h.b16 %v1189
        %v1344 = vunpack.c.l.b16 %v1190
        %v1345 = vunpack.c.h.b16 %v1190
        %v1346 = vunpack.c.l.b16 %v1191
        %v1347 = vunpack.c.h.b16 %v1191
        %v1348 = vunpack.c.l.b16 %v1192
        %v1349 = vunpack.c.h.b16 %v1192
        %v1350 = vunpack.c.l.b16 %v1193
        %v1351 = vunpack.c.h.b16 %v1193
        %v1352 = vunpack.c.l.b16 %v1194
        %v1353 = vunpack.c.h.b16 %v1194
        %v1354 = vunpack.c.l.b16 %v1195
        %v1355 = vunpack.c.h.b16 %v1195
        %v1356 = vunpack.c.l.b16 %v1196
        %v1357 = vunpack.c.h.b16 %v1196
        %v1358 = vunpack.c.l.b16 %v1197
        %v1359 = vunpack.c.h.b16 %v1197
        %v1360 = vunpack.c.l.b16 %v1198
        %v1361 = vunpack.c.h.b16 %v1198
        %v1362 = vunpack.c.l.b16 %v1199
        %v1363 = vunpack.c.h.b16 %v1199
        %v1364 = vunpack.c.l.b16 %v1200
        %v1365 = vunpack.c.h.b16 %v1200
        %v1366 = vunpack.c.l.b16 %v1201
        %v1367 = vunpack.c.h.b16 %v1201
        %v1368 = vunpack.c.l.b16 %v1202
        %v1369 = vunpack.c.h.b16 %v1202
        %v1370 = vunpack.c.l.b16 %v1203
        %v1371 = vunpack.c.h.b16 %v1203
        %v1372 = vunpack.c.l.b16 %v1204
        %v1373 = vunpack.c.h.b16 %v1204
        %v1374 = vunpack.c.l.b16 %v1205
        %v1375 = vunpack.c.h.b16 %v1205
        %v1376 = vunpack.c.l.b16 %v1206
        %v1377 = vunpack.c.h.b16 %v1206
        %v1378 = vunpack.c.l.b16 %v1207
        %v1379 = vunpack.c.h.b16 %v1207
        %v1380 = vunpack.c.l.b16 %v1208
        %v1381 = vunpack.c.h.b16 %v1208
        %v1382 = vunpack.c.l.b16 %v1209
        %v1383 = vunpack.c.h.b16 %v1209
        %v1384 = vunpack.c.l.b16 %v1210
        %v1385 = vunpack.c.h.b16 %v1210
        %v1386 = vunpack.c.l.b16 %v1211
        %v1387 = vunpack.c.h.b16 %v1211
        %v1388 = vunpack.c.l.b16 %v1212
        %v1389 = vunpack.c.h.b16 %v1212
        %v1390 = vunpack.c.l.b16 %v1213
        %v1391 = vunpack.c.h.b16 %v1213
        %v1392 = vunpack.c.l.b16 %v1214
        %v1393 = vunpack.c.h.b16 %v1214
        %v1394 = vunpack.c.l.b16 %v1215
        %v1395 = vunpack.c.h.b16 %v1215
        %v1396 = vunpack.c.l.b16 %v1216
        %v1397 = vunpack.c.h.b16 %v1216
        %v1398 = vunpack.c.l.b16 %v1217
        %v1399 = vunpack.c.h.b16 %v1217
        %v1400 = vunpack.c.l.b16 %v1218
        %v1401 = vunpack.c.h.b16 %v1218
        %v1402 = vunpack.c.l.b16 %v1219
        %v1403 = vunpack.c.h.b16 %v1219
        %v1404 = vunpack.c.l.b16 %v1220
        %v1405 = vunpack.c.h.b16 %v1220
        %v1406 = vunpack.c.l.b16 %v1221
        %v1407 = vunpack.c.h.b16 %v1221
        %v1408 = vunpack.c.l.b16 %v1222
        %v1409 = vunpack.c.h.b16 %v1222
        %v1410 = vunpack.c.l.b16 %v1223
        %v1411 = vunpack.c.h.b16 %v1223
        %v1412 = vunpack.c.l.b16 %v1224
        %v1413 = vunpack.c.h.b16 %v1224
        %v1414 = vunpack.c.l.b16 %v1225
        %v1415 = vunpack.c.h.b16 %v1225
        %v1416 = vunpack.c.l.b16 %v1226
        %v1417 = vunpack.c.h.b16 %v1226
        %v1418 = vunpack.c.l.b16 %v1227
        %v1419 = vunpack.c.h.b16 %v1227
        %v1420 = vunpack.c.l.b16 %v1228
        %v1421 = vunpack.c.h.b16 %v1228
        %v1422 = vunpack.c.l.b16 %v1229
        %v1423 = vunpack.c.h.b16 %v1229
        %v1424 = vunpack.c.l.b16 %v1230
        %v1425 = vunpack.c.h.b16 %v1230
        %v1426 = vunpack.c.l.b16 %v1231
        %v1427 = vunpack.c.h.b16 %v1231
        %v1428 = vunpack.c.l.b16 %v1232
        %v1429 = vunpack.c.h.b16 %v1232
        %v1430 = vunpack.c.l.b16 %v1233
        %v1431 = vunpack.c.h.b16 %v1233
        %v1432 = vunpack.c.l.b16 %v1234
        %v1433 = vunpack.c.h.b16 %v1234
        %v1434 = vunpack.c.l.b16 %v1235
        %v1435 = vunpack.c.h.b16 %v1235
        %v1436 = vunpack.c.l.b16 %v1236
        %v1437 = vunpack.c.h.b16 %v1236
        %v1438 = vunpack.c.l.b16 %v1237
        %v1439 = vunpack.c.h.b16 %v1237
        %v1440 = vunpack.c.l.b16 %v1238
        %v1441 = vunpack.c.h.b16 %v1238
        %v1442 = vunpack.c.l.b16 %v1239
        %v1443 = vunpack.c.h.b16 %v1239
        %v1444 = vpack.c.b16 %v1318, %v1316
        %v1445 = vpack.c.b16 %v1319, %v1317
        %v1446 = vpack.c.b16 %v1322, %v1320
        %v1447 = vpack.c.b16 %v1323, %v1321
        %v1448 = vpack.c.b16 %v1326, %v1324
        %v1449 = vpack.c.b16 %v1327, %v1325
        %v1450 = vpack.c.b16 %v1330, %v1328
        %v1451 = vpack.c.b16 %v1331, %v1329
        %v1452 = vpack.c.b16 %v1334, %v1332
        %v1453 = vpack.c.b16 %v1335, %v1333
        %v1454 = vpack.c.b16 %v1338, %v1336
        %v1455 = vpack.c.b16 %v1339, %v1337
        %v1456 = vpack.c.b16 %v1342, %v1340
        %v1457 = vpack.c.b16 %v1343, %v1341
        %v1458 = vpack.c.b16 %v1346, %v1344
        %v1459 = vpack.c.b16 %v1347, %v1345
        %v1460 = vpack.c.b16 %v1350, %v1348
        %v1461 = vpack.c.b16 %v1351, %v1349
        %v1462 = vpack.c.b16 %v1354, %v1352
        %v1463 = vpack.c.b16 %v1355, %v1353
        %v1464 = vpack.c.b16 %v1358, %v1356
        %v1465 = vpack.c.b16 %v1359, %v1357
        %v1466 = vpack.c.b16 %v1362, %v1360
        %v1467 = vpack.c.b16 %v1363, %v1361
        %v1468 = vpack.c.b16 %v1366, %v1364
        %v1469 = vpack.c.b16 %v1367, %v1365
        %v1470 = vpack.c.b16 %v1370, %v1368
        %v1471 = vpack.c.b16 %v1371, %v1369
        %v1472 = vpack.c.b16 %v1374, %v1372
        %v1473 = vpack.c.b16 %v1375, %v1373
        %v1474 = vpack.c.b16 %v1378, %v1376
        %v1475 = vpack.c.b16 %v1379, %v1377
        %v1476 = vpack.c.b16 %v1382, %v1380
        %v1477 = vpack.c.b16 %v1383, %v1381
        %v1478 = vpack.c.b16 %v1386, %v1384
        %v1479 = vpack.c.b16 %v1387, %v1385
        %v1480 = vpack.c.b16 %v1390, %v1388
        %v1481 = vpack.c.b16 %v1391, %v1389
        %v1482 = vpack.c.b16 %v1394, %v1392
        %v1483 = vpack.c.b16 %v1395, %v1393
        %v1484 = vpack.c.b16 %v1398, %v1396
        %v1485 = vpack.c.b16 %v1399, %v1397
        %v1486 = vpack.c.b16 %v1402, %v1400
        %v1487 = vpack.c.b16 %v1403, %v1401
        %v1488 = vpack.c.b16 %v1406, %v1404
        %v1489 = vpack.c.b16 %v1407, %v1405
        %v1490 = vpack.c.b16 %v1410, %v1408
        %v1491 = vpack.c.b16 %v1411, %v1409
        %v1492 = vpack.c.b16 %v1414, %v1412
        %v1493 = vpack.c.b16 %v1415, %v1413
        %v1494 = vpack.c.b16 %v1418, %v1416
        %v1495 = vpack.c.b16 %v1419, %v1417
        %v1496 = vpack.c.b16 %v1422, %v1420
        %v1497 = vpack.c.b16 %v1423, %v1421
        %v1498 = vpack.c.b16 %v1426, %v1424
        %v1499 = vpack.c.b16 %v1427, %v1425
        %v1500 = vpack.c.b16 %v1430, %v1428
        %v1501 = vpack.c.b16 %v1431, %v1429
        %v1502 = vpack.c.b16 %v1434, %v1432
        %v1503 = vpack.c.b16 %v1435, %v1433
        %v1504 = vpack.c.b16 %v1438, %v1436
        %v1505 = vpack.c.b16 %v1439, %v1437
        %v1506 = vpack.c.b16 %v1442, %v1440
        %v1507 = vpack.c.b16 %v1443, %v1441
        %1572 = vmatprep.subr.bf16.mxu0 %v1445
        %1573 = vmatpush1.bf16.msra.mxu0 %v1444
        %1574 = vmatprep.subr.bf16.mxu0 %v1447
        %1575 = vmatpush1.bf16.msra.mxu0 %v1446
        %1576 = vmatprep.subr.bf16.mxu0 %v1449
        %1577 = vmatpush1.bf16.msra.mxu0 %v1448
        %1578 = vmatprep.subr.bf16.mxu0 %v1451
        %1579 = vmatpush1.bf16.msra.mxu0 %v1450
        %1580 = vmatprep.subr.bf16.mxu0 %v1453
        %1581 = vmatpush1.bf16.msra.mxu0 %v1452
        %1582 = vmatprep.subr.bf16.mxu0 %v1455
        %1583 = vmatpush1.bf16.msra.mxu0 %v1454
        %1584 = vmatprep.subr.bf16.mxu0 %v1457
        %1585 = vmatpush1.bf16.msra.mxu0 %v1456
        %1586 = vmatprep.subr.bf16.mxu0 %v1459
        %1587 = vmatpush1.bf16.msra.mxu0 %v1458
        %1588 = vmatprep.subr.bf16.mxu0 %v1461
        %1589 = vmatpush1.bf16.msra.mxu0 %v1460
        %1590 = vmatprep.subr.bf16.mxu0 %v1463
        %1591 = vmatpush1.bf16.msra.mxu0 %v1462
        %1592 = vmatprep.subr.bf16.mxu0 %v1465
        %1593 = vmatpush1.bf16.msra.mxu0 %v1464
        %1594 = vmatprep.subr.bf16.mxu0 %v1467
        %1595 = vmatpush1.bf16.msra.mxu0 %v1466
        %1596 = vmatprep.subr.bf16.mxu0 %v1469
        %1597 = vmatpush1.bf16.msra.mxu0 %v1468
        %1598 = vmatprep.subr.bf16.mxu0 %v1471
        %1599 = vmatpush1.bf16.msra.mxu0 %v1470
        %1600 = vmatprep.subr.bf16.mxu0 %v1473
        %1601 = vmatpush1.bf16.msra.mxu0 %v1472
        %1602 = vmatprep.subr.bf16.mxu0 %v1475
        %1603 = vmatpush1.bf16.msra.mxu0 %v1474
        %1604 = vmatprep.mubr.bf16.mxu0 %v1145
        %1605 = vmatmul.mubr.bf16.gmra.mrb[0].mxu0 %v1144
        %v1606 = vpop.f32.mrb[0].mxu0
        %v1607 = vadd.f32 %v1245, %v1606
        %v1608 = vpop.f32.mrb[0].mxu0
        %v1609 = vadd.f32 %v1249, %v1608
        %v1610 = vpop.f32.mrb[0].mxu0
        %v1611 = vadd.f32 %v1245, %v1610
        %v1612 = vpop.f32.mrb[0].mxu0
        %v1613 = vadd.f32 %v1249, %v1612
        %1614 = vmatprep.mubr.bf16.mxu0 %v1149
        %1615 = vmatmul.mubr.bf16.gmra.mrb[0].mxu0 %v1148
        %v1616 = vpop.f32.mrb[0].mxu0
        %v1617 = vadd.f32 %v1245, %v1616
        %v1618 = vpop.f32.mrb[0].mxu0
        %v1619 = vadd.f32 %v1249, %v1618
        %v1620 = vpop.f32.mrb[0].mxu0
        %v1621 = vadd.f32 %v1245, %v1620
        %v1622 = vpop.f32.mrb[0].mxu0
        %v1623 = vadd.f32 %v1249, %v1622
        %1624 = vmatprep.mubr.bf16.mxu0 %v1153
        %1625 = vmatmul.mubr.bf16.gmra.mrb[0].mxu0 %v1152
        %v1626 = vpop.f32.mrb[0].mxu0
        %v1627 = vadd.f32 %v1245, %v1626
        %v1628 = vpop.f32.mrb[0].mxu0
        %v1629 = vadd.f32 %v1249, %v1628
        %v1630 = vpop.f32.mrb[0].mxu0
        %v1631 = vadd.f32 %v1245, %v1630
        %v1632 = vpop.f32.mrb[0].mxu0
        %v1633 = vadd.f32 %v1249, %v1632
        %1634 = vmatprep.mubr.bf16.mxu0 %v1157
        %1635 = vmatmul.mubr.bf16.gmra.mrb[0].mxu0 %v1156
        %v1636 = vpop.f32.mrb[0].mxu0
        %v1637 = vadd.f32 %v1245, %v1636
        %v1638 = vpop.f32.mrb[0].mxu0
        %v1639 = vadd.f32 %v1249, %v1638
        %v1640 = vpop.f32.mrb[0].mxu0
        %v1641 = vadd.f32 %v1245, %v1640
        %v1642 = vpop.f32.mrb[0].mxu0
        %v1643 = vadd.f32 %v1249, %v1642
        %1644 = vmatprep.mubr.bf16.mxu0 %v1161
        %1645 = vmatmul.mubr.bf16.gmra.mrb[0].mxu0 %v1160
        %v1646 = vpop.f32.mrb[0].mxu0
        %v1647 = vadd.f32 %v1245, %v1646
        %v1648 = vpop.f32.mrb[0].mxu0
        %v1649 = vadd.f32 %v1249, %v1648
        %v1650 = vpop.f32.mrb[0].mxu0
        %v1651 = vadd.f32 %v1245, %v1650
        %v1652 = vpop.f32.mrb[0].mxu0
        %v1653 = vadd.f32 %v1249, %v1652
        %1654 = vmatprep.mubr.bf16.mxu0 %v1165
        %1655 = vmatmul.mubr.bf16.gmra.mrb[0].mxu0 %v1164
        %v1656 = vpop.f32.mrb[0].mxu0
        %v1657 = vadd.f32 %v1245, %v1656
        %v1658 = vpop.f32.mrb[0].mxu0
        %v1659 = vadd.f32 %v1249, %v1658
        %v1660 = vpop.f32.mrb[0].mxu0
        %v1661 = vadd.f32 %v1245, %v1660
        %v1662 = vpop.f32.mrb[0].mxu0
        %v1663 = vadd.f32 %v1249, %v1662
        %1664 = vmatprep.mubr.bf16.mxu0 %v1169
        %1665 = vmatmul.mubr.bf16.gmra.mrb[0].mxu0 %v1168
        %v1666 = vpop.f32.mrb[0].mxu0
        %v1667 = vadd.f32 %v1245, %v1666
        %v1668 = vpop.f32.mrb[0].mxu0
        %v1669 = vadd.f32 %v1249, %v1668
        %v1670 = vpop.f32.mrb[0].mxu0
        %v1671 = vadd.f32 %v1245, %v1670
        %v1672 = vpop.f32.mrb[0].mxu0
        %v1673 = vadd.f32 %v1249, %v1672
        %1674 = vmatprep.mubr.bf16.mxu0 %v1173
        %1675 = vmatmul.mubr.bf16.gmra.mrb[0].mxu0 %v1172
        %v1676 = vpop.f32.mrb[0].mxu0
        %v1677 = vadd.f32 %v1245, %v1676
        %v1678 = vpop.f32.mrb[0].mxu0
        %v1679 = vadd.f32 %v1249, %v1678
        %v1680 = vpop.f32.mrb[0].mxu0
        %v1681 = vadd.f32 %v1245, %v1680
        %v1682 = vpop.f32.mrb[0].mxu0
        %v1683 = vadd.f32 %v1249, %v1682
        %1684 = vdwg.mxu0
        %1685 = vmatprep.subr.bf16.mxu0 %v1477
        %1686 = vmatpush1.bf16.msra.mxu0 %v1476
        %1687 = vmatprep.subr.bf16.mxu0 %v1479
        %1688 = vmatpush1.bf16.msra.mxu0 %v1478
        %1689 = vmatprep.subr.bf16.mxu0 %v1481
        %1690 = vmatpush1.bf16.msra.mxu0 %v1480
        %1691 = vmatprep.subr.bf16.mxu0 %v1483
        %1692 = vmatpush1.bf16.msra.mxu0 %v1482
        %1693 = vmatprep.subr.bf16.mxu0 %v1485
        %1694 = vmatpush1.bf16.msra.mxu0 %v1484
        %1695 = vmatprep.subr.bf16.mxu0 %v1487
        %1696 = vmatpush1.bf16.msra.mxu0 %v1486
        %1697 = vmatprep.subr.bf16.mxu0 %v1489
        %1698 = vmatpush1.bf16.msra.mxu0 %v1488
        %1699 = vmatprep.subr.bf16.mxu0 %v1491
        %1700 = vmatpush1.bf16.msra.mxu0 %v1490
        %1701 = vmatprep.subr.bf16.mxu0 %v1493
        %1702 = vmatpush1.bf16.msra.mxu0 %v1492
        %1703 = vmatprep.subr.bf16.mxu0 %v1495
        %1704 = vmatpush1.bf16.msra.mxu0 %v1494
        %1705 = vmatprep.subr.bf16.mxu0 %v1497
        %1706 = vmatpush1.bf16.msra.mxu0 %v1496
        %1707 = vmatprep.subr.bf16.mxu0 %v1499
        %1708 = vmatpush1.bf16.msra.mxu0 %v1498
        %1709 = vmatprep.subr.bf16.mxu0 %v1501
        %1710 = vmatpush1.bf16.msra.mxu0 %v1500
        %1711 = vmatprep.subr.bf16.mxu0 %v1503
        %1712 = vmatpush1.bf16.msra.mxu0 %v1502
        %1713 = vmatprep.subr.bf16.mxu0 %v1505
        %1714 = vmatpush1.bf16.msra.mxu0 %v1504
        %1715 = vmatprep.subr.bf16.mxu0 %v1507
        %1716 = vmatpush1.bf16.msra.mxu0 %v1506
        %1717 = vmatprep.mubr.bf16.mxu0 %v1147
        %1718 = vmatmul.mubr.bf16.gmra.mrb[0].mxu0 %v1146
        %v1719 = vpop.f32.mrb[0].mxu0
        %v1720 = vadd.f32 %v1607, %v1719
        %v1721 = vpop.f32.mrb[0].mxu0
        %v1722 = vadd.f32 %v1609, %v1721
        %v1723 = vpop.f32.mrb[0].mxu0
        %v1724 = vadd.f32 %v1611, %v1723
        %v1725 = vpop.f32.mrb[0].mxu0
        %v1726 = vadd.f32 %v1613, %v1725
        %1727 = vmatprep.mubr.bf16.mxu0 %v1151
        %1728 = vmatmul.mubr.bf16.gmra.mrb[0].mxu0 %v1150
        %v1729 = vpop.f32.mrb[0].mxu0
        %v1730 = vadd.f32 %v1617, %v1729
        %v1731 = vpop.f32.mrb[0].mxu0
        %v1732 = vadd.f32 %v1619, %v1731
        %v1733 = vpop.f32.mrb[0].mxu0
        %v1734 = vadd.f32 %v1621, %v1733
        %v1735 = vpop.f32.mrb[0].mxu0
        %v1736 = vadd.f32 %v1623, %v1735
        %1737 = vmatprep.mubr.bf16.mxu0 %v1155
        %1738 = vmatmul.mubr.bf16.gmra.mrb[0].mxu0 %v1154
        %v1739 = vpop.f32.mrb[0].mxu0
        %v1740 = vadd.f32 %v1627, %v1739
        %v1741 = vpop.f32.mrb[0].mxu0
        %v1742 = vadd.f32 %v1629, %v1741
        %v1743 = vpop.f32.mrb[0].mxu0
        %v1744 = vadd.f32 %v1631, %v1743
        %v1745 = vpop.f32.mrb[0].mxu0
        %v1746 = vadd.f32 %v1633, %v1745
        %1747 = vmatprep.mubr.bf16.mxu0 %v1159
        %1748 = vmatmul.mubr.bf16.gmra.mrb[0].mxu0 %v1158
        %v1749 = vpop.f32.mrb[0].mxu0
        %v1750 = vadd.f32 %v1637, %v1749
        %v1751 = vpop.f32.mrb[0].mxu0
        %v1752 = vadd.f32 %v1639, %v1751
        %v1753 = vpop.f32.mrb[0].mxu0
        %v1754 = vadd.f32 %v1641, %v1753
        %v1755 = vpop.f32.mrb[0].mxu0
        %v1756 = vadd.f32 %v1643, %v1755
        %1757 = vmatprep.mubr.bf16.mxu0 %v1163
        %1758 = vmatmul.mubr.bf16.gmra.mrb[0].mxu0 %v1162
        %v1759 = vpop.f32.mrb[0].mxu0
        %v1760 = vadd.f32 %v1647, %v1759
        %v1761 = vpop.f32.mrb[0].mxu0
        %v1762 = vadd.f32 %v1649, %v1761
        %v1763 = vpop.f32.mrb[0].mxu0
        %v1764 = vadd.f32 %v1651, %v1763
        %v1765 = vpop.f32.mrb[0].mxu0
        %v1766 = vadd.f32 %v1653, %v1765
        %1767 = vmatprep.mubr.bf16.mxu0 %v1167
        %1768 = vmatmul.mubr.bf16.gmra.mrb[0].mxu0 %v1166
        %v1769 = vpop.f32.mrb[0].mxu0
        %v1770 = vadd.f32 %v1657, %v1769
        %v1771 = vpop.f32.mrb[0].mxu0
        %v1772 = vadd.f32 %v1659, %v1771
        %v1773 = vpop.f32.mrb[0].mxu0
        %v1774 = vadd.f32 %v1661, %v1773
        %v1775 = vpop.f32.mrb[0].mxu0
        %v1776 = vadd.f32 %v1663, %v1775
        %1777 = vmatprep.mubr.bf16.mxu0 %v1171
        %1778 = vmatmul.mubr.bf16.gmra.mrb[0].mxu0 %v1170
        %v1779 = vpop.f32.mrb[0].mxu0
        %v1780 = vadd.f32 %v1667, %v1779
        %v1781 = vpop.f32.mrb[0].mxu0
        %v1782 = vadd.f32 %v1669, %v1781
        %v1783 = vpop.f32.mrb[0].mxu0
        %v1784 = vadd.f32 %v1671, %v1783
        %v1785 = vpop.f32.mrb[0].mxu0
        %v1786 = vadd.f32 %v1673, %v1785
        %1787 = vmatprep.mubr.bf16.mxu0 %v1175
        %1788 = vmatmul.mubr.bf16.gmra.mrb[0].mxu0 %v1174
        %v1789 = vpop.f32.mrb[0].mxu0
        %v1790 = vadd.f32 %v1677, %v1789
        %v1791 = vpop.f32.mrb[0].mxu0
        %v1792 = vadd.f32 %v1679, %v1791
        %v1793 = vpop.f32.mrb[0].mxu0
        %v1794 = vadd.f32 %v1681, %v1793
        %v1795 = vpop.f32.mrb[0].mxu0
        %v1796 = vadd.f32 %v1683, %v1795
        %1797 = vdwg.mxu0
        %vm1798 = vcmp.gt.f32.partialorder %v1720, 0.0
        %vm1799 = vcmp.gt.f32.partialorder %v1722, 0.0
        %vm1800 = vcmp.gt.f32.partialorder %v1724, 0.0
        %vm1801 = vcmp.gt.f32.partialorder %v1726, 0.0
        %vm1802 = vcmp.gt.f32.partialorder %v1730, 0.0
        %vm1803 = vcmp.gt.f32.partialorder %v1732, 0.0
        %vm1804 = vcmp.gt.f32.partialorder %v1734, 0.0
        %vm1805 = vcmp.gt.f32.partialorder %v1736, 0.0
        %vm1806 = vcmp.gt.f32.partialorder %v1740, 0.0
        %vm1807 = vcmp.gt.f32.partialorder %v1742, 0.0
        %vm1808 = vcmp.gt.f32.partialorder %v1744, 0.0
        %vm1809 = vcmp.gt.f32.partialorder %v1746, 0.0
        %vm1810 = vcmp.gt.f32.partialorder %v1750, 0.0
        %vm1811 = vcmp.gt.f32.partialorder %v1752, 0.0
        %vm1812 = vcmp.gt.f32.partialorder %v1754, 0.0
        %vm1813 = vcmp.gt.f32.partialorder %v1756, 0.0
        %vm1814 = vcmp.gt.f32.partialorder %v1760, 0.0
        %vm1815 = vcmp.gt.f32.partialorder %v1762, 0.0
        %vm1816 = vcmp.gt.f32.partialorder %v1764, 0.0
        %vm1817 = vcmp.gt.f32.partialorder %v1766, 0.0
        %vm1818 = vcmp.gt.f32.partialorder %v1770, 0.0
        %vm1819 = vcmp.gt.f32.partialorder %v1772, 0.0
        %vm1820 = vcmp.gt.f32.partialorder %v1774, 0.0
        %vm1821 = vcmp.gt.f32.partialorder %v1776, 0.0
        %vm1822 = vcmp.gt.f32.partialorder %v1780, 0.0
        %vm1823 = vcmp.gt.f32.partialorder %v1782, 0.0
        %vm1824 = vcmp.gt.f32.partialorder %v1784, 0.0
        %vm1825 = vcmp.gt.f32.partialorder %v1786, 0.0
        %vm1826 = vcmp.gt.f32.partialorder %v1790, 0.0
        %vm1827 = vcmp.gt.f32.partialorder %v1792, 0.0
        %vm1828 = vcmp.gt.f32.partialorder %v1794, 0.0
        %vm1829 = vcmp.gt.f32.partialorder %v1796, 0.0
        %v1830 = vmul.f32 %v1720, 0.2
        %v1831 = vmul.f32 %v1722, 0.2
        %v1832 = vmul.f32 %v1724, 0.2
        %v1833 = vmul.f32 %v1726, 0.2
        %v1834 = vmul.f32 %v1730, 0.2
        %v1835 = vmul.f32 %v1732, 0.2
        %v1836 = vmul.f32 %v1734, 0.2
        %v1837 = vmul.f32 %v1736, 0.2
        %v1838 = vmul.f32 %v1740, 0.2
        %v1839 = vmul.f32 %v1742, 0.2
        %v1840 = vmul.f32 %v1744, 0.2
        %v1841 = vmul.f32 %v1746, 0.2
        %v1842 = vmul.f32 %v1750, 0.2
        %v1843 = vmul.f32 %v1752, 0.2
        %v1844 = vmul.f32 %v1754, 0.2
        %v1845 = vmul.f32 %v1756, 0.2
        %v1846 = vmul.f32 %v1760, 0.2
        %v1847 = vmul.f32 %v1762, 0.2
        %v1848 = vmul.f32 %v1764, 0.2
        %v1849 = vmul.f32 %v1766, 0.2
        %v1850 = vmul.f32 %v1770, 0.2
        %v1851 = vmul.f32 %v1772, 0.2
        %v1852 = vmul.f32 %v1774, 0.2
        %v1853 = vmul.f32 %v1776, 0.2
        %v1854 = vmul.f32 %v1780, 0.2
        %v1855 = vmul.f32 %v1782, 0.2
        %v1856 = vmul.f32 %v1784, 0.2
        %v1857 = vmul.f32 %v1786, 0.2
        %v1858 = vmul.f32 %v1790, 0.2
        %v1859 = vmul.f32 %v1792, 0.2
        %v1860 = vmul.f32 %v1794, 0.2
        %v1861 = vmul.f32 %v1796, 0.2
        %v1862 = vsel %vm1798, %v1720, %v1830
        %v1863 = vsel %vm1799, %v1722, %v1831
        %v1864 = vsel %vm1800, %v1724, %v1832
        %v1865 = vsel %vm1801, %v1726, %v1833
        %v1866 = vsel %vm1802, %v1730, %v1834
        %v1867 = vsel %vm1803, %v1732, %v1835
        %v1868 = vsel %vm1804, %v1734, %v1836
        %v1869 = vsel %vm1805, %v1736, %v1837
        %v1870 = vsel %vm1806, %v1740, %v1838
        %v1871 = vsel %vm1807, %v1742, %v1839
        %v1872 = vsel %vm1808, %v1744, %v1840
        %v1873 = vsel %vm1809, %v1746, %v1841
        %v1874 = vsel %vm1810, %v1750, %v1842
        %v1875 = vsel %vm1811, %v1752, %v1843
        %v1876 = vsel %vm1812, %v1754, %v1844
        %v1877 = vsel %vm1813, %v1756, %v1845
        %v1878 = vsel %vm1814, %v1760, %v1846
        %v1879 = vsel %vm1815, %v1762, %v1847
        %v1880 = vsel %vm1816, %v1764, %v1848
        %v1881 = vsel %vm1817, %v1766, %v1849
        %v1882 = vsel %vm1818, %v1770, %v1850
        %v1883 = vsel %vm1819, %v1772, %v1851
        %v1884 = vsel %vm1820, %v1774, %v1852
        %v1885 = vsel %vm1821, %v1776, %v1853
        %v1886 = vsel %vm1822, %v1780, %v1854
        %v1887 = vsel %vm1823, %v1782, %v1855
        %v1888 = vsel %vm1824, %v1784, %v1856
        %v1889 = vsel %vm1825, %v1786, %v1857
        %v1890 = vsel %vm1826, %v1790, %v1858
        %v1891 = vsel %vm1827, %v1792, %v1859
        %v1892 = vsel %vm1828, %v1794, %v1860
        %v1893 = vsel %vm1829, %v1796, %v1861
        %v1894 = vpack.c.bf16 %v1864, %v1862
        %v1895 = vpack.c.bf16 %v1865, %v1863
        %v1896 = vpack.c.bf16 %v1868, %v1866
        %v1897 = vpack.c.bf16 %v1869, %v1867
        %v1898 = vpack.c.bf16 %v1872, %v1870
        %v1899 = vpack.c.bf16 %v1873, %v1871
        %v1900 = vpack.c.bf16 %v1876, %v1874
        %v1901 = vpack.c.bf16 %v1877, %v1875
        %v1902 = vpack.c.bf16 %v1880, %v1878
        %v1903 = vpack.c.bf16 %v1881, %v1879
        %v1904 = vpack.c.bf16 %v1884, %v1882
        %v1905 = vpack.c.bf16 %v1885, %v1883
        %v1906 = vpack.c.bf16 %v1888, %v1886
        %v1907 = vpack.c.bf16 %v1889, %v1887
        %v1908 = vpack.c.bf16 %v1892, %v1890
        %v1909 = vpack.c.bf16 %v1893, %v1891
        %v1910 = vld [vmem:[#allocation12] sm:$0xf]
        %v1911 = vld [vmem:[#allocation12 + $0x4] sm:$0xf]
        %v1912 = vld [vmem:[#allocation12 + $0x8] sm:$0xf]
        %v1913 = vld [vmem:[#allocation12 + $0xc] sm:$0xf]
        %v1914 = vld [vmem:[#allocation12 + $0x10] sm:$0xf]
        %v1915 = vld [vmem:[#allocation12 + $0x14] sm:$0xf]
        %v1916 = vld [vmem:[#allocation12 + $0x18] sm:$0xf]
        %v1917 = vld [vmem:[#allocation12 + $0x1c] sm:$0xf]
        %v1918 = vld [vmem:[#allocation12 + $0x20] sm:$0xf]
        %v1919 = vld [vmem:[#allocation12 + $0x24] sm:$0xf]
        %v1920 = vld [vmem:[#allocation12 + $0x28] sm:$0xf]
        %v1921 = vld [vmem:[#allocation12 + $0x2c] sm:$0xf]
        %v1922 = vld [vmem:[#allocation12 + $0x30] sm:$0xf]
        %v1923 = vld [vmem:[#allocation12 + $0x34] sm:$0xf]
        %v1924 = vld [vmem:[#allocation12 + $0x38] sm:$0xf]
        %v1925 = vld [vmem:[#allocation12 + $0x3c] sm:$0xf]
        %v1926 = vld [vmem:[#allocation12 + $0x40] sm:$0xf]
        %v1927 = vld [vmem:[#allocation12 + $0x44] sm:$0xf]
        %v1928 = vld [vmem:[#allocation12 + $0x48] sm:$0xf]
        %v1929 = vld [vmem:[#allocation12 + $0x4c] sm:$0xf]
        %v1930 = vld [vmem:[#allocation12 + $0x50] sm:$0xf]
        %v1931 = vld [vmem:[#allocation12 + $0x54] sm:$0xf]
        %v1932 = vld [vmem:[#allocation12 + $0x58] sm:$0xf]
        %v1933 = vld [vmem:[#allocation12 + $0x5c] sm:$0xf]
        %v1934 = vld [vmem:[#allocation12 + $0x60] sm:$0xf]
        %v1935 = vld [vmem:[#allocation12 + $0x64] sm:$0xf]
        %v1936 = vld [vmem:[#allocation12 + $0x68] sm:$0xf]
        %v1937 = vld [vmem:[#allocation12 + $0x6c] sm:$0xf]
        %v1938 = vld [vmem:[#allocation12 + $0x70] sm:$0xf]
        %v1939 = vld [vmem:[#allocation12 + $0x74] sm:$0xf]
        %v1940 = vld [vmem:[#allocation12 + $0x78] sm:$0xf]
        %v1941 = vld [vmem:[#allocation12 + $0x7c] sm:$0xf]
        %v1942 = vld [vmem:[#allocation14] sm:$0x1]
        %v1944 = vlaneseq
        %v1945 = vshrl.u32 %v1944, 7
        %v1946 = vsub.s32 0, %v1945
        %v1947 = vrot.slane %v1942, %v1946
        %v1981 = vunpack.c.l.b16 %v1910
        %v1982 = vunpack.c.l.b16 %v1911
        %v1983 = vunpack.c.l.b16 %v1912
        %v1984 = vunpack.c.l.b16 %v1913
        %v1985 = vunpack.c.l.b16 %v1914
        %v1986 = vunpack.c.l.b16 %v1915
        %v1987 = vunpack.c.l.b16 %v1916
        %v1988 = vunpack.c.l.b16 %v1917
        %v1989 = vunpack.c.l.b16 %v1918
        %v1990 = vunpack.c.l.b16 %v1919
        %v1991 = vunpack.c.l.b16 %v1920
        %v1992 = vunpack.c.l.b16 %v1921
        %v1993 = vunpack.c.l.b16 %v1922
        %v1994 = vunpack.c.l.b16 %v1923
        %v1995 = vunpack.c.l.b16 %v1924
        %v1996 = vunpack.c.l.b16 %v1925
        %v1997 = vunpack.c.l.b16 %v1926
        %v1998 = vunpack.c.l.b16 %v1927
        %v1999 = vunpack.c.l.b16 %v1928
        %v2000 = vunpack.c.l.b16 %v1929
        %v2001 = vunpack.c.l.b16 %v1930
        %v2002 = vunpack.c.l.b16 %v1931
        %v2003 = vunpack.c.l.b16 %v1932
        %v2004 = vunpack.c.l.b16 %v1933
        %v2005 = vunpack.c.l.b16 %v1934
        %v2006 = vunpack.c.l.b16 %v1935
        %v2007 = vunpack.c.l.b16 %v1936
        %v2008 = vunpack.c.l.b16 %v1937
        %v2009 = vunpack.c.l.b16 %v1938
        %v2010 = vunpack.c.l.b16 %v1939
        %v2011 = vunpack.c.l.b16 %v1940
        %v2012 = vunpack.c.l.b16 %v1941
        %v2013 = vpack.c.b16 %v1982, %v1981
        %v2014 = vpack.c.b16 %v1984, %v1983
        %v2015 = vpack.c.b16 %v1986, %v1985
        %v2016 = vpack.c.b16 %v1988, %v1987
        %v2017 = vpack.c.b16 %v1990, %v1989
        %v2018 = vpack.c.b16 %v1992, %v1991
        %v2019 = vpack.c.b16 %v1994, %v1993
        %v2020 = vpack.c.b16 %v1996, %v1995
        %v2021 = vpack.c.b16 %v1998, %v1997
        %v2022 = vpack.c.b16 %v2000, %v1999
        %v2023 = vpack.c.b16 %v2002, %v2001
        %v2024 = vpack.c.b16 %v2004, %v2003
        %v2025 = vpack.c.b16 %v2006, %v2005
        %v2026 = vpack.c.b16 %v2008, %v2007
        %v2027 = vpack.c.b16 %v2010, %v2009
        %v2028 = vpack.c.b16 %v2012, %v2011
        %2045 = vmatprep.subr.bf16.mxu0 0
        %2046 = vmatpush1.bf16.msra.mxu0 %v2013
        %2047 = vmatprep.subr.bf16.mxu0 0
        %2048 = vmatpush1.bf16.msra.mxu0 %v2014
        %2049 = vmatprep.subr.bf16.mxu0 0
        %2050 = vmatpush1.bf16.msra.mxu0 %v2015
        %2051 = vmatprep.subr.bf16.mxu0 0
        %2052 = vmatpush1.bf16.msra.mxu0 %v2016
        %2053 = vmatprep.subr.bf16.mxu0 0
        %2054 = vmatpush1.bf16.msra.mxu0 %v2017
        %2055 = vmatprep.subr.bf16.mxu0 0
        %2056 = vmatpush1.bf16.msra.mxu0 %v2018
        %2057 = vmatprep.subr.bf16.mxu0 0
        %2058 = vmatpush1.bf16.msra.mxu0 %v2019
        %2059 = vmatprep.subr.bf16.mxu0 0
        %2060 = vmatpush1.bf16.msra.mxu0 %v2020
        %2061 = vmatprep.subr.bf16.mxu0 0
        %2062 = vmatpush1.bf16.msra.mxu0 %v2021
        %2063 = vmatprep.subr.bf16.mxu0 0
        %2064 = vmatpush1.bf16.msra.mxu0 %v2022
        %2065 = vmatprep.subr.bf16.mxu0 0
        %2066 = vmatpush1.bf16.msra.mxu0 %v2023
        %2067 = vmatprep.subr.bf16.mxu0 0
        %2068 = vmatpush1.bf16.msra.mxu0 %v2024
        %2069 = vmatprep.subr.bf16.mxu0 0
        %2070 = vmatpush1.bf16.msra.mxu0 %v2025
        %2071 = vmatprep.subr.bf16.mxu0 0
        %2072 = vmatpush1.bf16.msra.mxu0 %v2026
        %2073 = vmatprep.subr.bf16.mxu0 0
        %2074 = vmatpush1.bf16.msra.mxu0 %v2027
        %2075 = vmatprep.subr.bf16.mxu0 0
        %2076 = vmatpush1.bf16.msra.mxu0 %v2028
        %2077 = vmatprep.mubr.bf16.mxu0 %v1895
        %2078 = vmatmul.mubr.bf16.gmra.mrb[0].mxu0 %v1894
        %v2079 = vpop.f32.mrb[0].mxu0
        %v2080 = vadd.f32 %v1947, %v2079
        %v2081 = vpop.f32.mrb[0].mxu0
        %v2082 = vpop.f32.mrb[0].mxu0
        %v2083 = vadd.f32 %v1947, %v2082
        %v2084 = vpop.f32.mrb[0].mxu0
        %2085 = vmatprep.mubr.bf16.mxu0 %v1897
        %2086 = vmatmul.mubr.bf16.gmra.mrb[0].mxu0 %v1896
        %v2087 = vpop.f32.mrb[0].mxu0
        %v2088 = vadd.f32 %v1947, %v2087
        %v2089 = vpop.f32.mrb[0].mxu0
        %v2090 = vpop.f32.mrb[0].mxu0
        %v2091 = vadd.f32 %v1947, %v2090
        %v2092 = vpop.f32.mrb[0].mxu0
        %2093 = vmatprep.mubr.bf16.mxu0 %v1899
        %2094 = vmatmul.mubr.bf16.gmra.mrb[0].mxu0 %v1898
        %v2095 = vpop.f32.mrb[0].mxu0
        %v2096 = vadd.f32 %v1947, %v2095
        %v2097 = vpop.f32.mrb[0].mxu0
        %v2098 = vpop.f32.mrb[0].mxu0
        %v2099 = vadd.f32 %v1947, %v2098
        %v2100 = vpop.f32.mrb[0].mxu0
        %2101 = vmatprep.mubr.bf16.mxu0 %v1901
        %2102 = vmatmul.mubr.bf16.gmra.mrb[0].mxu0 %v1900
        %v2103 = vpop.f32.mrb[0].mxu0
        %v2104 = vadd.f32 %v1947, %v2103
        %v2105 = vpop.f32.mrb[0].mxu0
        %v2106 = vpop.f32.mrb[0].mxu0
        %v2107 = vadd.f32 %v1947, %v2106
        %v2108 = vpop.f32.mrb[0].mxu0
        %2109 = vmatprep.mubr.bf16.mxu0 %v1903
        %2110 = vmatmul.mubr.bf16.gmra.mrb[0].mxu0 %v1902
        %v2111 = vpop.f32.mrb[0].mxu0
        %v2112 = vadd.f32 %v1947, %v2111
        %v2113 = vpop.f32.mrb[0].mxu0
        %v2114 = vpop.f32.mrb[0].mxu0
        %v2115 = vadd.f32 %v1947, %v2114
        %v2116 = vpop.f32.mrb[0].mxu0
        %2117 = vmatprep.mubr.bf16.mxu0 %v1905
        %2118 = vmatmul.mubr.bf16.gmra.mrb[0].mxu0 %v1904
        %v2119 = vpop.f32.mrb[0].mxu0
        %v2120 = vadd.f32 %v1947, %v2119
        %v2121 = vpop.f32.mrb[0].mxu0
        %v2122 = vpop.f32.mrb[0].mxu0
        %v2123 = vadd.f32 %v1947, %v2122
        %v2124 = vpop.f32.mrb[0].mxu0
        %2125 = vmatprep.mubr.bf16.mxu0 %v1907
        %2126 = vmatmul.mubr.bf16.gmra.mrb[0].mxu0 %v1906
        %v2127 = vpop.f32.mrb[0].mxu0
        %v2128 = vadd.f32 %v1947, %v2127
        %v2129 = vpop.f32.mrb[0].mxu0
        %v2130 = vpop.f32.mrb[0].mxu0
        %v2131 = vadd.f32 %v1947, %v2130
        %v2132 = vpop.f32.mrb[0].mxu0
        %2133 = vmatprep.mubr.bf16.mxu0 %v1909
        %2134 = vmatmul.mubr.bf16.gmra.mrb[0].mxu0 %v1908
        %v2135 = vpop.f32.mrb[0].mxu0
        %v2136 = vadd.f32 %v1947, %v2135
        %v2137 = vpop.f32.mrb[0].mxu0
        %v2138 = vpop.f32.mrb[0].mxu0
        %v2139 = vadd.f32 %v1947, %v2138
        %v2140 = vpop.f32.mrb[0].mxu0
        %2141 = vdwg.mxu0
        %vm2142 = vcmp.gt.f32.partialorder %v2080, 0.0
        %vm2143 = vcmp.gt.f32.partialorder %v2083, 0.0
        %vm2144 = vcmp.gt.f32.partialorder %v2088, 0.0
        %vm2145 = vcmp.gt.f32.partialorder %v2091, 0.0
        %vm2146 = vcmp.gt.f32.partialorder %v2096, 0.0
        %vm2147 = vcmp.gt.f32.partialorder %v2099, 0.0
        %vm2148 = vcmp.gt.f32.partialorder %v2104, 0.0
        %vm2149 = vcmp.gt.f32.partialorder %v2107, 0.0
        %vm2150 = vcmp.gt.f32.partialorder %v2112, 0.0
        %vm2151 = vcmp.gt.f32.partialorder %v2115, 0.0
        %vm2152 = vcmp.gt.f32.partialorder %v2120, 0.0
        %vm2153 = vcmp.gt.f32.partialorder %v2123, 0.0
        %vm2154 = vcmp.gt.f32.partialorder %v2128, 0.0
        %vm2155 = vcmp.gt.f32.partialorder %v2131, 0.0
        %vm2156 = vcmp.gt.f32.partialorder %v2136, 0.0
        %vm2157 = vcmp.gt.f32.partialorder %v2139, 0.0
        %v2158 = vmul.f32 %v2080, 0.2
        %v2159 = vmul.f32 %v2083, 0.2
        %v2160 = vmul.f32 %v2088, 0.2
        %v2161 = vmul.f32 %v2091, 0.2
        %v2162 = vmul.f32 %v2096, 0.2
        %v2163 = vmul.f32 %v2099, 0.2
        %v2164 = vmul.f32 %v2104, 0.2
        %v2165 = vmul.f32 %v2107, 0.2
        %v2166 = vmul.f32 %v2112, 0.2
        %v2167 = vmul.f32 %v2115, 0.2
        %v2168 = vmul.f32 %v2120, 0.2
        %v2169 = vmul.f32 %v2123, 0.2
        %v2170 = vmul.f32 %v2128, 0.2
        %v2171 = vmul.f32 %v2131, 0.2
        %v2172 = vmul.f32 %v2136, 0.2
        %v2173 = vmul.f32 %v2139, 0.2
        %v2174 = vsel %vm2142, %v2080, %v2158
        %v2175 = vsel %vm2143, %v2083, %v2159
        %v2176 = vsel %vm2144, %v2088, %v2160
        %v2177 = vsel %vm2145, %v2091, %v2161
        %v2178 = vsel %vm2146, %v2096, %v2162
        %v2179 = vsel %vm2147, %v2099, %v2163
        %v2180 = vsel %vm2148, %v2104, %v2164
        %v2181 = vsel %vm2149, %v2107, %v2165
        %v2182 = vsel %vm2150, %v2112, %v2166
        %v2183 = vsel %vm2151, %v2115, %v2167
        %v2184 = vsel %vm2152, %v2120, %v2168
        %v2185 = vsel %vm2153, %v2123, %v2169
        %v2186 = vsel %vm2154, %v2128, %v2170
        %v2187 = vsel %vm2155, %v2131, %v2171
        %v2188 = vsel %vm2156, %v2136, %v2172
        %v2189 = vsel %vm2157, %v2139, %v2173
        %v2190 = vpack.c.bf16 %v2175, %v2174
        %v2191 = vpack.c.bf16 %v2177, %v2176
        %v2192 = vpack.c.bf16 %v2179, %v2178
        %v2193 = vpack.c.bf16 %v2181, %v2180
        %v2194 = vpack.c.bf16 %v2183, %v2182
        %v2195 = vpack.c.bf16 %v2185, %v2184
        %v2196 = vpack.c.bf16 %v2187, %v2186
        %v2197 = vpack.c.bf16 %v2189, %v2188
        %v2198 = vld [vmem:[#allocation15] sm:$0x1]
        %v2199 = vld [vmem:[#allocation2] sm:$0x1]
        %2201 = vset.pattern.permute.xlu0 0
        %2202 = vperm.xlu0 %2201, %v2199
        %v2203 = vpop.permute.xlu0 %2202
        %v2205 = vlaneseq
        %v2206 = vshrl.u32 %v2205, 7
        %v2207 = vsub.s32 0, %v2206
        %v2208 = vrot.slane %v2203, %v2207
        %2209 = vmatprep.subr.bf16.mxu0 0
        %2210 = vmatpush1.bf16.xpose.msra.mxu0 %v2190
        %2211 = vmatprep.subr.bf16.mxu0 0
        %2212 = vmatpush1.bf16.xpose.msra.mxu0 %v2191
        %2213 = vmatprep.subr.bf16.mxu0 0
        %2214 = vmatpush1.bf16.xpose.msra.mxu0 %v2192
        %2215 = vmatprep.subr.bf16.mxu0 0
        %2216 = vmatpush1.bf16.xpose.msra.mxu0 %v2193
        %2217 = vmatprep.subr.bf16.mxu0 0
        %2218 = vmatpush1.bf16.xpose.msra.mxu0 %v2194
        %2219 = vmatprep.subr.bf16.mxu0 0
        %2220 = vmatpush1.bf16.xpose.msra.mxu0 %v2195
        %2221 = vmatprep.subr.bf16.mxu0 0
        %2222 = vmatpush1.bf16.xpose.msra.mxu0 %v2196
        %2223 = vmatprep.subr.bf16.mxu0 0
        %2224 = vmatpush1.bf16.xpose.msra.mxu0 %v2197
        %2225 = vmatprep.subr.bf16.mxu0 0
        %2226 = vmatpush1.bf16.xpose.msra.mxu0 0
        %2227 = vmatprep.subr.bf16.mxu0 0
        %2228 = vmatpush1.bf16.xpose.msra.mxu0 0
        %2229 = vmatprep.subr.bf16.mxu0 0
        %2230 = vmatpush1.bf16.xpose.msra.mxu0 0
        %2231 = vmatprep.subr.bf16.mxu0 0
        %2232 = vmatpush1.bf16.xpose.msra.mxu0 0
        %2233 = vmatprep.subr.bf16.mxu0 0
        %2234 = vmatpush1.bf16.xpose.msra.mxu0 0
        %2235 = vmatprep.subr.bf16.mxu0 0
        %2236 = vmatpush1.bf16.xpose.msra.mxu0 0
        %2237 = vmatprep.subr.bf16.mxu0 0
        %2238 = vmatpush1.bf16.xpose.msra.mxu0 0
        %2239 = vmatprep.subr.bf16.mxu0 0
        %2240 = vmatpush1.bf16.xpose.msra.mxu0 0
        %2241 = vmatprep.mubr.bf16.mxu0 0
        %2242 = vmatmul.mubr.bf16.gmra.mrb[0].mxu0 %v2198
        %v2243 = vpop.f32.mrb[0].mxu0
        %v2244 = vadd.f32 %v2208, %v2243
        %v2245 = vpop.f32.mrb[0].mxu0
        %v2246 = vpop.f32.mrb[0].mxu0
        %v2247 = vpop.f32.mrb[0].mxu0
        %2248 = vdwg.mxu0
        %v2249 = vxor.u32 %v2244, 2147483648
        %v2250 = vmul.f32 %v2249, 1.442695
        %v2251 = vpow.pop %v2250
        %v2252 = vadd.f32 %v2251, 1.0
        %v2253 = vrcp.pop %v2252
        %v2254 = vmul.f32 1.0, %v2253
        %2255 = vst [vmem:[%s445] sm:$0x1] %v2254
        %s2256 = sand.u32 %s234, 1
        %s2257 = scalar_lea.sflag [#allocation5], %s2256
        %s2258 = sand.u32 %s234, 1
        %s2259 = scalar_lea.vmem [#allocation17], %s2258
        // Predicated region
        $region89: #{tpu_custom_call.1} parent=55 // pred_check
          %p2260 = pneg %p244
        $region90: #{tpu_custom_call.1} parent=55 // pred_check_branch
          %2262 = sbr.rel (%p2260) target = $region92
        $region91: #{tpu_custom_call.1} parent=55 // pred_region
          %s2264 = ssub.s32 16, 16
          %2265 = vsyncadd %s2257, %s2264
          %s2266 = smul.addr %s32, 16
          %s2267 = scalar_lea.hbm %s9, %s2266
          %s2269 = sshll.u32 %s2259, 4
          %s2270 = int_to_ptr.vmem [resolvable:$true] %s2269
          %2272 = dma.vmem_to_hbm [thread:$0]  %s2270, 16, %s2267, %s2257
        $region92: #{tpu_custom_call.1} parent=55 // pred_fallthru
          _
      $region56: #{tpu_custom_call.1} parent=5 // pred_fallthru
        _
      %p2273 = scmp.le.s32.totalorder 2, %s27
      // Predicated region
      $region93: #{tpu_custom_call.1} parent=5 // pred_check
        %p2274 = pneg %p2273
      $region94: #{tpu_custom_call.1} parent=5 // pred_check_branch
        %2276 = sbr.rel (%p2274) target = $region96
      $region95: #{tpu_custom_call.1} parent=5 // pred_region
        %s2277 = ssub.s32 %s27, 2
        // Predicated region
        $region97: #{tpu_custom_call.1} parent=95 // pred_check
          %p2278 = pneg %p250
        $region98: #{tpu_custom_call.1} parent=95 // pred_check_branch
          %2280 = sbr.rel (%p2278) target = $region100
        $region99: #{tpu_custom_call.1} parent=95 // pred_region
          %s2281 = sand.u32 %s235, 1
          %s2282 = scalar_lea.sflag [#allocation5], %s2281
          %s2283 = sand.u32 %s235, 1
          %s2284 = scalar_lea.vmem [#allocation17], %s2283
          %2285 = dma.done %s2282, 16
        $region100: #{tpu_custom_call.1} parent=95 // pred_fallthru
          _
      $region96: #{tpu_custom_call.1} parent=5 // pred_fallthru
        _
    $region6: #{tpu_custom_call.1} parent=1 // loop_footer
      %s31 = sadd.s32 1, %s27
    $region7: #{tpu_custom_call.1} parent=1 // loop_footer_branch
      %26 = sbr.rel target = $region3
    $region8: #{tpu_custom_call.1} parent=1 // loop_exit
      _
    %2286 = vsyncpa [#allocation4], 1
    %s2287 = scalar_lea.sflag [#allocation4], 1
    %2288 = vsyncpa %s2287, 1
    %2289 = vsyncpa [#allocation7], 1
    %2290 = vsyncpa [#allocation10], 1
    %2291 = vsyncpa [#allocation13], 1
    %2292 = vsyncpa [#allocation16], 1
    %2293 = vsyncpa [#allocation5], 1
    %s2294 = scalar_lea.sflag [#allocation5], 1
    %2295 = vsyncpa %s2294, 1

</llo_original>
